<compile_context>
chip_gen: v5e
topology: v5e:2x2
jax: 0.10.0
libtpu: 0.0.40
codegen_flags: <defaults>
</compile_context>

<pallas_src>
import jax
import jax.numpy as jnp
from jax.experimental import pallas as pl
from jax.experimental.pallas import tpu as pltpu

STATE_DIM = 28
HIDDEN_DIM = 512
INIT_W = 0.003

# Batch tile: 128 saturates v5e's 4x128 MXU rows; 256 is a good choice on
# v6e/v7x (2x256 MXU).  For tiny batches the wrapper shrinks the tile to the
# (8-aligned) batch so no work is wasted.
DEFAULT_TILE_M = 128


def _round_up(n, m):
    return (n + m - 1) // m * m


def value_network_kernel(x_ref,
                         w1_ref, b1_ref,
                         w2_ref, b2_ref,
                         w3_ref, b3_ref,
                         w4_ref, b4_ref,
                         o_ref):
    # x: (TM, 28) f32; weights bf16; biases f32; accumulation in f32 on MXU.
    x = x_ref[...].astype(jnp.bfloat16)

    # Layer 1: (TM, 28) @ (28, 512) -> f32, + bias, ReLU (f32 epilogue)
    h = jnp.dot(x, w1_ref[...], preferred_element_type=jnp.float32)
    h = jnp.maximum(h + b1_ref[...], 0.0)

    # Layer 2: (TM, 512) @ (512, 512)
    h = jnp.dot(h.astype(jnp.bfloat16), w2_ref[...],
                preferred_element_type=jnp.float32)
    h = jnp.maximum(h + b2_ref[...], 0.0)

    # Layer 3: (TM, 512) @ (512, 512)
    h = jnp.dot(h.astype(jnp.bfloat16), w3_ref[...],
                preferred_element_type=jnp.float32)
    h = jnp.maximum(h + b3_ref[...], 0.0)

    # Layer 4 (value head, N=1): VPU multiply + lane reduction instead of a
    # degenerate 1-column MXU matmul.  w4 is a (1, 512) bf16 row; b4 is an
    # SMEM scalar.
    w4_row = w4_ref[...].astype(jnp.float32)          # (1, 512)
    v = jnp.sum(h * w4_row, axis=-1, keepdims=True)   # (TM, 1) f32
    o_ref[...] = (v + b4_ref[0, 0]).astype(o_ref.dtype)


def value_network_forward(x, params, *, tile_m=DEFAULT_TILE_M):
    """x: (B, STATE_DIM) f32. Returns (B, 1) f32."""
    (w1, b1, w2, b2, w3, b3, w4, b4) = params
    B = x.shape[0]

    # Tile the batch: sublane-aligned (multiple of 8), capped at tile_m.
    tm = min(tile_m, _round_up(B, 8))
    b_pad = _round_up(B, tm)
    if b_pad != B:
        x = jnp.pad(x, ((0, b_pad - B), (0, 0)))
    grid = (b_pad // tm,)

    # Weights/biases: full-block, constant index_map -> DMA'd once, stay
    # resident in VMEM across all batch tiles.
    def resident(a):
        return pl.BlockSpec(a.shape, lambda i: (0,) * a.ndim)

    out = pl.pallas_call(
        value_network_kernel,
        out_shape=jax.ShapeDtypeStruct((b_pad, 1), jnp.float32),
        grid=grid,
        in_specs=[
            pl.BlockSpec((tm, STATE_DIM), lambda i: (i, 0)),   # x tile
            resident(w1), resident(b1),
            resident(w2), resident(b2),
            resident(w3), resident(b3),
            resident(w4),
            pl.BlockSpec(memory_space=pltpu.MemorySpace.SMEM),  # b4 scalar
        ],
        out_specs=pl.BlockSpec((tm, 1), lambda i: (i, 0)),
        compiler_params=pltpu.CompilerParams(
            dimension_semantics=("parallel",)),  # megacore-shard batch (v7x)
    )(x, w1, b1, w2, b2, w3, b3, w4, b4)

    return out[:B]


def init_params(key):
    """Deterministic init matching PyTorch semantics:
       linear1-3: U(-1/sqrt(fan_in), 1/sqrt(fan_in)); linear4: U(-init_w, init_w).
       Weights stored transposed as (in, out) and cast to bf16 for streaming;
       w4 stored as a (1, HIDDEN_DIM) row; biases kept in f32."""
    ks = jax.random.split(key, 8)

    def uniform(k, shape, bound):
        return jax.random.uniform(k, shape, jnp.float32, -bound, bound)

    bnd1 = 1.0 / jnp.sqrt(jnp.float32(STATE_DIM))
    bnd2 = 1.0 / jnp.sqrt(jnp.float32(HIDDEN_DIM))

    w1 = uniform(ks[0], (STATE_DIM, HIDDEN_DIM), bnd1).astype(jnp.bfloat16)
    b1 = uniform(ks[1], (1, HIDDEN_DIM), bnd1)
    w2 = uniform(ks[2], (HIDDEN_DIM, HIDDEN_DIM), bnd2).astype(jnp.bfloat16)
    b2 = uniform(ks[3], (1, HIDDEN_DIM), bnd2)
    w3 = uniform(ks[4], (HIDDEN_DIM, HIDDEN_DIM), bnd2).astype(jnp.bfloat16)
    b3 = uniform(ks[5], (1, HIDDEN_DIM), bnd2)
    w4 = uniform(ks[6], (1, HIDDEN_DIM), INIT_W).astype(jnp.bfloat16)
    b4 = uniform(ks[7], (1, 1), INIT_W)
    return (w1, b1, w2, b2, w3, b3, w4, b4)


def reference_forward(x, params):
    """Pure-JAX reference using the same bf16-weight / f32-accumulate math."""
    (w1, b1, w2, b2, w3, b3, w4, b4) = params

    def dot_bf16(a, w):
        return jnp.dot(a.astype(jnp.bfloat16), w,
                       preferred_element_type=jnp.float32)

    h = jnp.maximum(dot_bf16(x, w1) + b1, 0.0)
    h = jnp.maximum(dot_bf16(h, w2) + b2, 0.0)
    h = jnp.maximum(dot_bf16(h, w3) + b3, 0.0)
    return jnp.sum(h * w4.astype(jnp.float32), axis=-1, keepdims=True) + b4[0, 0]


if __name__ == "__main__":
    key = jax.random.PRNGKey(0)
    k_params, k_x = jax.random.split(key)

    params = init_params(k_params)
    batch = 8
    x = jax.random.normal(k_x, (batch, STATE_DIM), jnp.float32)

    out = value_network_forward(x, params)
    out = jax.block_until_ready(out)

    ref = reference_forward(x, params)
    assert out.shape == (batch, 1), out.shape
    assert jnp.allclose(out, ref, atol=2e-2, rtol=2e-2), (out, ref)

    print("KERNEL_OK")
</pallas_src>

<mosaic_0001>
module attributes {stable_mosaic.version = 11 : i64} {
  func.func @value_network_kernel(%arg0: i32, %arg1: memref<8x28xf32, #tpu.memory_space<vmem>>, %arg2: memref<28x512xbf16, #tpu.memory_space<vmem>>, %arg3: memref<1x512xf32, #tpu.memory_space<vmem>>, %arg4: memref<512x512xbf16, #tpu.memory_space<vmem>>, %arg5: memref<1x512xf32, #tpu.memory_space<vmem>>, %arg6: memref<512x512xbf16, #tpu.memory_space<vmem>>, %arg7: memref<1x512xf32, #tpu.memory_space<vmem>>, %arg8: memref<1x512xbf16, #tpu.memory_space<vmem>>, %arg9: memref<1x1xf32, #tpu.memory_space<smem>>, %arg10: memref<8x1xf32, #tpu.memory_space<vmem>>) attributes {dimension_semantics = [#tpu.dimension_semantics<parallel>], iteration_bounds = array<i64: 1>, scalar_prefetch = 0 : i64, scratch_operands = 0 : i64, tpu.core_type = #tpu.core_type<tc>, window_params = [{transform_indices = @transform_0, window_bounds = array<i64: 8, 28>}, {pipeline_mode = #tpu.pipeline_mode<synchronous>, transform_indices = @transform_1, window_bounds = array<i64: 28, 512>}, {pipeline_mode = #tpu.pipeline_mode<synchronous>, transform_indices = @transform_2, window_bounds = array<i64: 1, 512>}, {pipeline_mode = #tpu.pipeline_mode<synchronous>, transform_indices = @transform_3, window_bounds = array<i64: 512, 512>}, {pipeline_mode = #tpu.pipeline_mode<synchronous>, transform_indices = @transform_4, window_bounds = array<i64: 1, 512>}, {pipeline_mode = #tpu.pipeline_mode<synchronous>, transform_indices = @transform_5, window_bounds = array<i64: 512, 512>}, {pipeline_mode = #tpu.pipeline_mode<synchronous>, transform_indices = @transform_6, window_bounds = array<i64: 1, 512>}, {pipeline_mode = #tpu.pipeline_mode<synchronous>, transform_indices = @transform_7, window_bounds = array<i64: 1, 512>}, {transform_indices = @transform_8, window_bounds = array<i64: 1, 1>}, {transform_indices = @transform_9, window_bounds = array<i64: 8, 1>}]} {
    %c0 = arith.constant 0 : index
    %c0_0 = arith.constant 0 : index
    %0 = vector.load %arg1[%c0, %c0_0] : memref<8x28xf32, #tpu.memory_space<vmem>>, vector<8x28xf32>
    %1 = arith.truncf %0 : vector<8x28xf32> to vector<8x28xbf16>
    %c0_1 = arith.constant 0 : index
    %c0_2 = arith.constant 0 : index
    %2 = vector.load %arg2[%c0_1, %c0_2] : memref<28x512xbf16, #tpu.memory_space<vmem>>, vector<28x512xbf16>
    %cst = arith.constant dense<0.000000e+00> : vector<8x512xf32>
    %3 = tpu.matmul %1, %2, %cst {dimension_numbers = #tpu.dot_dimension_numbers<[1], [0], [0], [1], [0, 0, 1, 1], [], []>} : vector<8x28xbf16>, vector<28x512xbf16>, vector<8x512xf32> -> vector<8x512xf32>
    %c0_3 = arith.constant 0 : index
    %c0_4 = arith.constant 0 : index
    %4 = vector.load %arg3[%c0_3, %c0_4] : memref<1x512xf32, #tpu.memory_space<vmem>>, vector<1x512xf32>
    %5 = vector.broadcast %4 : vector<1x512xf32> to vector<8x512xf32>
    %6 = arith.addf %3, %5 : vector<8x512xf32>
    %cst_5 = arith.constant 0.000000e+00 : f32
    %7 = vector.broadcast %cst_5 : f32 to vector<8x512xf32>
    %8 = arith.maximumf %6, %7 : vector<8x512xf32>
    %9 = arith.truncf %8 : vector<8x512xf32> to vector<8x512xbf16>
    %c0_6 = arith.constant 0 : index
    %c0_7 = arith.constant 0 : index
    %10 = vector.load %arg4[%c0_6, %c0_7] : memref<512x512xbf16, #tpu.memory_space<vmem>>, vector<512x512xbf16>
    %cst_8 = arith.constant dense<0.000000e+00> : vector<8x512xf32>
    %11 = tpu.matmul %9, %10, %cst_8 {dimension_numbers = #tpu.dot_dimension_numbers<[1], [0], [0], [1], [0, 0, 1, 1], [], []>} : vector<8x512xbf16>, vector<512x512xbf16>, vector<8x512xf32> -> vector<8x512xf32>
    %c0_9 = arith.constant 0 : index
    %c0_10 = arith.constant 0 : index
    %12 = vector.load %arg5[%c0_9, %c0_10] : memref<1x512xf32, #tpu.memory_space<vmem>>, vector<1x512xf32>
    %13 = vector.broadcast %12 : vector<1x512xf32> to vector<8x512xf32>
    %14 = arith.addf %11, %13 : vector<8x512xf32>
    %cst_11 = arith.constant 0.000000e+00 : f32
    %15 = vector.broadcast %cst_11 : f32 to vector<8x512xf32>
    %16 = arith.maximumf %14, %15 : vector<8x512xf32>
    %17 = arith.truncf %16 : vector<8x512xf32> to vector<8x512xbf16>
    %c0_12 = arith.constant 0 : index
    %c0_13 = arith.constant 0 : index
    %18 = vector.load %arg6[%c0_12, %c0_13] : memref<512x512xbf16, #tpu.memory_space<vmem>>, vector<512x512xbf16>
    %cst_14 = arith.constant dense<0.000000e+00> : vector<8x512xf32>
    %19 = tpu.matmul %17, %18, %cst_14 {dimension_numbers = #tpu.dot_dimension_numbers<[1], [0], [0], [1], [0, 0, 1, 1], [], []>} : vector<8x512xbf16>, vector<512x512xbf16>, vector<8x512xf32> -> vector<8x512xf32>
    %c0_15 = arith.constant 0 : index
    %c0_16 = arith.constant 0 : index
    %20 = vector.load %arg7[%c0_15, %c0_16] : memref<1x512xf32, #tpu.memory_space<vmem>>, vector<1x512xf32>
    %21 = vector.broadcast %20 : vector<1x512xf32> to vector<8x512xf32>
    %22 = arith.addf %19, %21 : vector<8x512xf32>
    %cst_17 = arith.constant 0.000000e+00 : f32
    %23 = vector.broadcast %cst_17 : f32 to vector<8x512xf32>
    %24 = arith.maximumf %22, %23 : vector<8x512xf32>
    %c0_18 = arith.constant 0 : index
    %c0_19 = arith.constant 0 : index
    %25 = vector.load %arg8[%c0_18, %c0_19] : memref<1x512xbf16, #tpu.memory_space<vmem>>, vector<1x512xbf16>
    %26 = arith.extf %25 : vector<1x512xbf16> to vector<1x512xf32>
    %27 = vector.broadcast %26 : vector<1x512xf32> to vector<8x512xf32>
    %28 = arith.mulf %24, %27 : vector<8x512xf32>
    %cst_20 = arith.constant dense<0.000000e+00> : vector<8xf32>
    %29 = vector.multi_reduction <add>, %28, %cst_20 [1] : vector<8x512xf32> to vector<8xf32>
    %30 = vector.shape_cast %29 : vector<8xf32> to vector<8x1xf32>
    %c0_21 = arith.constant 0 : index
    %c0_22 = arith.constant 0 : index
    %31 = memref.load %arg9[%c0_21, %c0_22] : memref<1x1xf32, #tpu.memory_space<smem>>
    %32 = vector.broadcast %31 : f32 to vector<8x1xf32>
    %33 = arith.addf %30, %32 : vector<8x1xf32>
    %c0_23 = arith.constant 0 : index
    %c0_24 = arith.constant 0 : index
    %34 = vector.load %arg10[%c0_23, %c0_24] : memref<8x1xf32, #tpu.memory_space<vmem>>, vector<8x1xf32>
    tpu.vector_store %arg10[%c0_23, %c0_24], %33 {strides = array<i32>} : memref<8x1xf32, #tpu.memory_space<vmem>>, vector<8x1xf32>,
    return
  }
  func.func @transform_0(%arg0: i32) -> (i32, i32) {
    %c0_i32 = arith.constant 0 : i32
    %c0_i32_0 = arith.constant 0 : i32
    return %arg0, %c0_i32 : i32, i32
  }
  func.func @transform_1(%arg0: i32) -> (i32, i32) {
    %c0_i32 = arith.constant 0 : i32
    %c0_i32_0 = arith.constant 0 : i32
    %c0_i32_1 = arith.constant 0 : i32
    return %c0_i32, %c0_i32_0 : i32, i32
  }
  func.func @transform_2(%arg0: i32) -> (i32, i32) {
    %c0_i32 = arith.constant 0 : i32
    %c0_i32_0 = arith.constant 0 : i32
    %c0_i32_1 = arith.constant 0 : i32
    return %c0_i32, %c0_i32_0 : i32, i32
  }
  func.func @transform_3(%arg0: i32) -> (i32, i32) {
    %c0_i32 = arith.constant 0 : i32
    %c0_i32_0 = arith.constant 0 : i32
    %c0_i32_1 = arith.constant 0 : i32
    return %c0_i32, %c0_i32_0 : i32, i32
  }
  func.func @transform_4(%arg0: i32) -> (i32, i32) {
    %c0_i32 = arith.constant 0 : i32
    %c0_i32_0 = arith.constant 0 : i32
    %c0_i32_1 = arith.constant 0 : i32
    return %c0_i32, %c0_i32_0 : i32, i32
  }
  func.func @transform_5(%arg0: i32) -> (i32, i32) {
    %c0_i32 = arith.constant 0 : i32
    %c0_i32_0 = arith.constant 0 : i32
    %c0_i32_1 = arith.constant 0 : i32
    return %c0_i32, %c0_i32_0 : i32, i32
  }
  func.func @transform_6(%arg0: i32) -> (i32, i32) {
    %c0_i32 = arith.constant 0 : i32
    %c0_i32_0 = arith.constant 0 : i32
    %c0_i32_1 = arith.constant 0 : i32
    return %c0_i32, %c0_i32_0 : i32, i32
  }
  func.func @transform_7(%arg0: i32) -> (i32, i32) {
    %c0_i32 = arith.constant 0 : i32
    %c0_i32_0 = arith.constant 0 : i32
    %c0_i32_1 = arith.constant 0 : i32
    return %c0_i32, %c0_i32_0 : i32, i32
  }
  func.func @transform_8(%arg0: i32) -> (i32, i32) {
    %c0_i32 = arith.constant 0 : i32
    %c0_i32_0 = arith.constant 0 : i32
    %c0_i32_1 = arith.constant 0 : i32
    return %c0_i32, %c0_i32_0 : i32, i32
  }
  func.func @transform_9(%arg0: i32) -> (i32, i32) {
    %c0_i32 = arith.constant 0 : i32
    %c0_i32_0 = arith.constant 0 : i32
    return %arg0, %c0_i32 : i32, i32
  }
}

</mosaic_0001>

<llo_original>
// kernel: tpu_custom_call.1
$region0: #{tpu_custom_call.1}
  #allocation0 [shape = 'u32[]', space=smem, size = 0x4, offset = 0x4, fixed_abs, tag = 'smem constant byte address 0x4 - core index']
  #allocation1 [shape = 'u32[72,128]{1,0:T(1,128)}', space=vmem, size = 0x9000, scoped, tag = 'internal scratch']
  #allocation2 [shape = 'f32[1,1]{1,0:T(1,128)S(6)}', space=smem, size = 0x200, scoped, tag = 'scoped memory for tpu_custom_call.1']
  %s0 = inlined_call_operand.hbm [shape: f32[8,28], index: 0, kind: input, shape index: {}]
  %s1 = inlined_call_operand.hbm [shape: bf16[28,512], index: 1, kind: input, shape index: {}]
  %s2 = inlined_call_operand.hbm [shape: f32[1,512], index: 2, kind: input, shape index: {}]
  %s3 = inlined_call_operand.hbm [shape: bf16[512,512], index: 3, kind: input, shape index: {}]
  %s4 = inlined_call_operand.vmem [shape: f32[1,512], index: 4, kind: input, shape index: {}]
  %s5 = inlined_call_operand.hbm [shape: bf16[512,512], index: 5, kind: input, shape index: {}]
  %s6 = inlined_call_operand.hbm [shape: f32[1,512], index: 6, kind: input, shape index: {}]
  %s7 = inlined_call_operand.vmem [shape: bf16[1,512], index: 7, kind: input, shape index: {}]
  %s8 = inlined_call_operand.<no memory space> [shape: f32[1,1], index: 8, kind: input, shape index: {}]
  %s9 = inlined_call_operand.vmem [shape: f32[8,1], index: 9, kind: output, shape index: {}]
  %s10 = sld [smem:[#allocation0]]
  $region70: #{tpu_custom_call.1} parent=0
    _
  %s12 = ssub.s32 1, %s10
  %s13 = scalar_select 0, %s12, %s10
  %14 = sst [smem:[#allocation2]] %s8
  $region1: #{tpu_custom_call.1} parent=0
    #allocation3 [shape = 'u8[4096]{0}', space=vmem, size = 0x1000, scoped, tag = 'input window, operand 0, single buffered']
    #allocation4 [shape = 's32[1]{0}', space=sflag, size = 0x4, scoped, tag = 'scoped memory for tpu_custom_call.1']
    #allocation5 [shape = 'u8[32768]{0}', space=vmem, size = 0x8000, scoped, tag = 'input window, operand 1, single buffered']
    #allocation6 [shape = 's32[1]{0}', space=sflag, size = 0x4, scoped, tag = 'scoped memory for tpu_custom_call.1']
    #allocation7 [shape = 'u8[2048]{0}', space=vmem, size = 0x800, scoped, tag = 'input window, operand 2, single buffered']
    #allocation8 [shape = 'u8[524288]{0}', space=vmem, size = 0x80000, scoped, tag = 'input window, operand 3, single buffered']
    #allocation9 [shape = 's32[1]{0}', space=sflag, size = 0x4, scoped, tag = 'scoped memory for tpu_custom_call.1']
    #allocation10 [shape = 'u8[524288]{0}', space=vmem, size = 0x80000, scoped, tag = 'input window, operand 5, single buffered']
    #allocation11 [shape = 'u8[2048]{0}', space=vmem, size = 0x800, scoped, tag = 'input window, operand 6, single buffered']
    #allocation12 [shape = 's32[1]{0}', space=sflag, size = 0x4, scoped, tag = 'scoped memory for tpu_custom_call.1']
    %15 = vsyncpa [#allocation4], 0
    %16 = vsyncpa [#allocation6], 0
    %17 = vsyncpa [#allocation9], 0
    %18 = vsyncpa [#allocation12], 0
    // Predicated region
    $region2: #{tpu_custom_call.1} parent=1 // pred_check
      _
    $region3: #{tpu_custom_call.1} parent=1 // pred_check_branch
      %20 = sbr.rel (0) target = $region5
    $region4: #{tpu_custom_call.1} parent=1 // pred_region
      %22 = vsyncadd [#allocation4], 0
      %s24 = sshll.u32 %s0, 4
      %s25 = int_to_ptr.hbm [resolvable:$true] %s24
      %s26 = sshll.u32 [#allocation3], 4
      %s27 = int_to_ptr.vmem [resolvable:$true] %s26
      %29 = dma.hbm_to_vmem [thread:$0]  %s25, 128, %s27, [#allocation4]
    $region5: #{tpu_custom_call.1} parent=1 // pred_fallthru
      _
    // Predicated region
    $region6: #{tpu_custom_call.1} parent=1 // pred_check
      _
    $region7: #{tpu_custom_call.1} parent=1 // pred_check_branch
      %31 = sbr.rel (0) target = $region9
    $region8: #{tpu_custom_call.1} parent=1 // pred_region
      %33 = vsyncadd [#allocation6], 0
      %s34 = sshll.u32 %s1, 4
      %s35 = int_to_ptr.hbm [resolvable:$true] %s34
      %s36 = sshll.u32 [#allocation5], 4
      %s37 = int_to_ptr.vmem [resolvable:$true] %s36
      %42 = dma.hbm_to_vmem [thread:$0]  %s35, 1024, %s37, [#allocation6], 256, 256, 16
    $region9: #{tpu_custom_call.1} parent=1 // pred_fallthru
      _
    // Predicated region
    $region10: #{tpu_custom_call.1} parent=1 // pred_check
      _
    $region11: #{tpu_custom_call.1} parent=1 // pred_check_branch
      %44 = sbr.rel (0) target = $region13
    $region12: #{tpu_custom_call.1} parent=1 // pred_region
      %46 = vsyncadd [#allocation6], 0
      %s48 = sshll.u32 %s2, 4
      %s49 = int_to_ptr.hbm [resolvable:$true] %s48
      %s50 = sshll.u32 [#allocation7], 4
      %s51 = int_to_ptr.vmem [resolvable:$true] %s50
      %53 = dma.hbm_to_vmem [thread:$0]  %s49, 64, %s51, [#allocation6]
    $region13: #{tpu_custom_call.1} parent=1 // pred_fallthru
      _
    // Predicated region
    $region14: #{tpu_custom_call.1} parent=1 // pred_check
      _
    $region15: #{tpu_custom_call.1} parent=1 // pred_check_branch
      %55 = sbr.rel (0) target = $region17
    $region16: #{tpu_custom_call.1} parent=1 // pred_region
      %57 = vsyncadd [#allocation9], 0
      %s58 = sshll.u32 %s3, 4
      %s59 = int_to_ptr.hbm [resolvable:$true] %s58
      %s60 = sshll.u32 [#allocation8], 4
      %s61 = int_to_ptr.vmem [resolvable:$true] %s60
      %66 = dma.hbm_to_vmem [thread:$0]  %s59, 16384, %s61, [#allocation9], 256, 256, 16
    $region17: #{tpu_custom_call.1} parent=1 // pred_fallthru
      _
    // Predicated region
    $region18: #{tpu_custom_call.1} parent=1 // pred_check
      _
    $region19: #{tpu_custom_call.1} parent=1 // pred_check_branch
      %68 = sbr.rel (0) target = $region21
    $region20: #{tpu_custom_call.1} parent=1 // pred_region
      _
    $region21: #{tpu_custom_call.1} parent=1 // pred_fallthru
      _
    // Predicated region
    $region22: #{tpu_custom_call.1} parent=1 // pred_check
      _
    $region23: #{tpu_custom_call.1} parent=1 // pred_check_branch
      %70 = sbr.rel (0) target = $region25
    $region24: #{tpu_custom_call.1} parent=1 // pred_region
      %72 = vsyncadd [#allocation9], 0
      %s73 = sshll.u32 %s5, 4
      %s74 = int_to_ptr.hbm [resolvable:$true] %s73
      %s75 = sshll.u32 [#allocation10], 4
      %s76 = int_to_ptr.vmem [resolvable:$true] %s75
      %81 = dma.hbm_to_vmem [thread:$0]  %s74, 16384, %s76, [#allocation9], 256, 256, 16
    $region25: #{tpu_custom_call.1} parent=1 // pred_fallthru
      _
    // Predicated region
    $region26: #{tpu_custom_call.1} parent=1 // pred_check
      _
    $region27: #{tpu_custom_call.1} parent=1 // pred_check_branch
      %83 = sbr.rel (0) target = $region29
    $region28: #{tpu_custom_call.1} parent=1 // pred_region
      %85 = vsyncadd [#allocation12], 0
      %s87 = sshll.u32 %s6, 4
      %s88 = int_to_ptr.hbm [resolvable:$true] %s87
      %s89 = sshll.u32 [#allocation11], 4
      %s90 = int_to_ptr.vmem [resolvable:$true] %s89
      %92 = dma.hbm_to_vmem [thread:$0]  %s88, 64, %s90, [#allocation12]
    $region29: #{tpu_custom_call.1} parent=1 // pred_fallthru
      _
    // Predicated region
    $region30: #{tpu_custom_call.1} parent=1 // pred_check
      _
    $region31: #{tpu_custom_call.1} parent=1 // pred_check_branch
      %94 = sbr.rel (0) target = $region33
    $region32: #{tpu_custom_call.1} parent=1 // pred_region
      _
    $region33: #{tpu_custom_call.1} parent=1 // pred_fallthru
      _
    // Predicated region
    $region34: #{tpu_custom_call.1} parent=1 // pred_check
      _
    $region35: #{tpu_custom_call.1} parent=1 // pred_check_branch
      %96 = sbr.rel (0) target = $region37
    $region36: #{tpu_custom_call.1} parent=1 // pred_region
      _
    $region37: #{tpu_custom_call.1} parent=1 // pred_fallthru
      _
    // Predicated region
    $region38: #{tpu_custom_call.1} parent=1 // pred_check
      _
    $region39: #{tpu_custom_call.1} parent=1 // pred_check_branch
      %98 = sbr.rel (0) target = $region41
    $region40: #{tpu_custom_call.1} parent=1 // pred_region
      %100 = dma.done [#allocation4], 128
    $region41: #{tpu_custom_call.1} parent=1 // pred_fallthru
      _
    // Predicated region
    $region42: #{tpu_custom_call.1} parent=1 // pred_check
      _
    $region43: #{tpu_custom_call.1} parent=1 // pred_check_branch
      %102 = sbr.rel (0) target = $region45
    $region44: #{tpu_custom_call.1} parent=1 // pred_region
      %104 = dma.done [#allocation6], 1024
    $region45: #{tpu_custom_call.1} parent=1 // pred_fallthru
      _
    // Predicated region
    $region46: #{tpu_custom_call.1} parent=1 // pred_check
      _
    $region47: #{tpu_custom_call.1} parent=1 // pred_check_branch
      %106 = sbr.rel (0) target = $region49
    $region48: #{tpu_custom_call.1} parent=1 // pred_region
      %108 = dma.done [#allocation6], 64
    $region49: #{tpu_custom_call.1} parent=1 // pred_fallthru
      _
    // Predicated region
    $region50: #{tpu_custom_call.1} parent=1 // pred_check
      _
    $region51: #{tpu_custom_call.1} parent=1 // pred_check_branch
      %110 = sbr.rel (0) target = $region53
    $region52: #{tpu_custom_call.1} parent=1 // pred_region
      %112 = dma.done [#allocation9], 16384
    $region53: #{tpu_custom_call.1} parent=1 // pred_fallthru
      _
    // Predicated region
    $region54: #{tpu_custom_call.1} parent=1 // pred_check
      _
    $region55: #{tpu_custom_call.1} parent=1 // pred_check_branch
      %114 = sbr.rel (0) target = $region57
    $region56: #{tpu_custom_call.1} parent=1 // pred_region
      %116 = dma.done [#allocation9], 16384
    $region57: #{tpu_custom_call.1} parent=1 // pred_fallthru
      _
    // Predicated region
    $region58: #{tpu_custom_call.1} parent=1 // pred_check
      _
    $region59: #{tpu_custom_call.1} parent=1 // pred_check_branch
      %118 = sbr.rel (0) target = $region61
    $region60: #{tpu_custom_call.1} parent=1 // pred_region
      %120 = dma.done [#allocation12], 64
    $region61: #{tpu_custom_call.1} parent=1 // pred_fallthru
      _
    %v122 = vld [vmem:[#allocation3] sm:$0xff]
    %v123 = vpack.c.bf16 %v122, %v122
    %v124 = vld [vmem:[#allocation5] sm:$0xff]
    %v125 = vld [vmem:[#allocation5 + $0x8] sm:$0xff]
    %v126 = vld [vmem:[#allocation5 + $0x10] sm:$0xff]
    %v127 = vld [vmem:[#allocation5 + $0x18] sm:$0xff]
    %v128 = vld [vmem:[#allocation5 + $0x20] sm:$0xff]
    %v129 = vld [vmem:[#allocation5 + $0x28] sm:$0xff]
    %v130 = vld [vmem:[#allocation5 + $0x30] sm:$0x33]
    %v131 = vld [vmem:[#allocation5 + $0x38] sm:$0x33]
    %v132 = vld [vmem:[#allocation7] sm:$0xf]
    %v134 = vperm.slane %v132, 0
    %v135 = vperm.slane %v132, 1
    %v136 = vperm.slane %v132, 2
    %v137 = vperm.slane %v132, 3
    %v150 = vunpack.c.l.b16 %v124
    %v151 = vunpack.c.h.b16 %v124
    %v152 = vunpack.c.l.b16 %v125
    %v153 = vunpack.c.h.b16 %v125
    %v154 = vunpack.c.l.b16 %v126
    %v155 = vunpack.c.h.b16 %v126
    %v156 = vunpack.c.l.b16 %v127
    %v157 = vunpack.c.h.b16 %v127
    %v158 = vunpack.c.l.b16 %v128
    %v159 = vunpack.c.h.b16 %v128
    %v160 = vunpack.c.l.b16 %v129
    %v161 = vunpack.c.h.b16 %v129
    %v162 = vunpack.c.l.b16 %v130
    %v163 = vunpack.c.h.b16 %v130
    %v164 = vunpack.c.l.b16 %v131
    %v165 = vunpack.c.h.b16 %v131
    %v166 = vpack.c.b16 %v154, %v150
    %v167 = vpack.c.b16 %v155, %v151
    %v168 = vpack.c.b16 %v156, %v152
    %v169 = vpack.c.b16 %v157, %v153
    %v170 = vpack.c.b16 %v162, %v158
    %v171 = vpack.c.b16 %v163, %v159
    %v172 = vpack.c.b16 %v164, %v160
    %v173 = vpack.c.b16 %v165, %v161
    %vm178 = vcmask 228352
    %v180 = vsel %vm178, %v123, 0
    %vm182 = vcmask 1045504
    %v184 = vsel %vm182, %v170, 0
    %v187 = vsel %vm182, %v171, 0
    %v190 = vsel %vm182, %v172, 0
    %v193 = vsel %vm182, %v173, 0
    %195 = vmatpush.bf16.msra.mxu0 0
    %196 = vmatpush.bf16.msra.mxu0 0
    %197 = vmatpush.bf16.msra.mxu0 0
    %198 = vmatpush.bf16.msra.mxu0 0
    %199 = vmatpush.bf16.msra.mxu0 0
    %200 = vmatpush.bf16.msra.mxu0 0
    %201 = vmatpush.bf16.msra.mxu0 %v184
    %202 = vmatpush.bf16.msra.mxu0 %v166
    %203 = vmatmul.bf16.gmra.mxu0 %v180
    %v204 = vpop.f32.mrf.mxu0
    %v205 = vadd.f32 %v134, %v204
    %v206 = vpop.f32.mrf.mxu0
    %207 = vdwg.mxu0
    %208 = vmatpush.bf16.msra.mxu0 0
    %209 = vmatpush.bf16.msra.mxu0 0
    %210 = vmatpush.bf16.msra.mxu0 0
    %211 = vmatpush.bf16.msra.mxu0 0
    %212 = vmatpush.bf16.msra.mxu0 0
    %213 = vmatpush.bf16.msra.mxu0 0
    %214 = vmatpush.bf16.msra.mxu0 %v187
    %215 = vmatpush.bf16.msra.mxu0 %v167
    %216 = vmatmul.bf16.gmra.mxu0 %v180
    %v217 = vpop.f32.mrf.mxu0
    %v218 = vadd.f32 %v135, %v217
    %v219 = vpop.f32.mrf.mxu0
    %220 = vdwg.mxu0
    %221 = vmatpush.bf16.msra.mxu0 0
    %222 = vmatpush.bf16.msra.mxu0 0
    %223 = vmatpush.bf16.msra.mxu0 0
    %224 = vmatpush.bf16.msra.mxu0 0
    %225 = vmatpush.bf16.msra.mxu0 0
    %226 = vmatpush.bf16.msra.mxu0 0
    %227 = vmatpush.bf16.msra.mxu0 %v190
    %228 = vmatpush.bf16.msra.mxu0 %v168
    %229 = vmatmul.bf16.gmra.mxu0 %v180
    %v230 = vpop.f32.mrf.mxu0
    %v231 = vadd.f32 %v136, %v230
    %v232 = vpop.f32.mrf.mxu0
    %233 = vdwg.mxu0
    %234 = vmatpush.bf16.msra.mxu0 0
    %235 = vmatpush.bf16.msra.mxu0 0
    %236 = vmatpush.bf16.msra.mxu0 0
    %237 = vmatpush.bf16.msra.mxu0 0
    %238 = vmatpush.bf16.msra.mxu0 0
    %239 = vmatpush.bf16.msra.mxu0 0
    %240 = vmatpush.bf16.msra.mxu0 %v193
    %241 = vmatpush.bf16.msra.mxu0 %v169
    %242 = vmatmul.bf16.gmra.mxu0 %v180
    %v243 = vpop.f32.mrf.mxu0
    %v244 = vadd.f32 %v137, %v243
    %v245 = vpop.f32.mrf.mxu0
    %246 = vdwg.mxu0
    %v247 = vmax.f32 %v205, 0.0
    %v248 = vmax.f32 %v218, 0.0
    %v249 = vmax.f32 %v231, 0.0
    %v250 = vmax.f32 %v244, 0.0
    %v251 = vpack.c.bf16 %v247, %v247
    %v252 = vpack.c.bf16 %v248, %v248
    %v253 = vpack.c.bf16 %v249, %v249
    %v254 = vpack.c.bf16 %v250, %v250
    %v255 = vld [vmem:[#allocation8] sm:$0xff]
    %v256 = vld [vmem:[#allocation8 + $0x8] sm:$0xff]
    %v257 = vld [vmem:[#allocation8 + $0x10] sm:$0xff]
    %v258 = vld [vmem:[#allocation8 + $0x18] sm:$0xff]
    %v259 = vld [vmem:[#allocation8 + $0x20] sm:$0xff]
    %v260 = vld [vmem:[#allocation8 + $0x28] sm:$0xff]
    %v261 = vld [vmem:[#allocation8 + $0x30] sm:$0xff]
    %v262 = vld [vmem:[#allocation8 + $0x38] sm:$0xff]
    %v263 = vld [vmem:[#allocation8 + $0x40] sm:$0xff]
    %v264 = vld [vmem:[#allocation8 + $0x48] sm:$0xff]
    %v265 = vld [vmem:[#allocation8 + $0x50] sm:$0xff]
    %v266 = vld [vmem:[#allocation8 + $0x58] sm:$0xff]
    %v267 = vld [vmem:[#allocation8 + $0x60] sm:$0xff]
    %v268 = vld [vmem:[#allocation8 + $0x68] sm:$0xff]
    %v269 = vld [vmem:[#allocation8 + $0x70] sm:$0xff]
    %v270 = vld [vmem:[#allocation8 + $0x78] sm:$0xff]
    %v271 = vld [vmem:[#allocation8 + $0x80] sm:$0xff]
    %v272 = vld [vmem:[#allocation8 + $0x88] sm:$0xff]
    %v273 = vld [vmem:[#allocation8 + $0x90] sm:$0xff]
    %v274 = vld [vmem:[#allocation8 + $0x98] sm:$0xff]
    %v275 = vld [vmem:[#allocation8 + $0xa0] sm:$0xff]
    %v276 = vld [vmem:[#allocation8 + $0xa8] sm:$0xff]
    %v277 = vld [vmem:[#allocation8 + $0xb0] sm:$0xff]
    %v278 = vld [vmem:[#allocation8 + $0xb8] sm:$0xff]
    %v279 = vld [vmem:[#allocation8 + $0xc0] sm:$0xff]
    %v280 = vld [vmem:[#allocation8 + $0xc8] sm:$0xff]
    %v281 = vld [vmem:[#allocation8 + $0xd0] sm:$0xff]
    %v282 = vld [vmem:[#allocation8 + $0xd8] sm:$0xff]
    %v283 = vld [vmem:[#allocation8 + $0xe0] sm:$0xff]
    %v284 = vld [vmem:[#allocation8 + $0xe8] sm:$0xff]
    %v285 = vld [vmem:[#allocation8 + $0xf0] sm:$0xff]
    %v286 = vld [vmem:[#allocation8 + $0xf8] sm:$0xff]
    %v287 = vld [vmem:[#allocation8 + $0x100] sm:$0xff]
    %v288 = vld [vmem:[#allocation8 + $0x108] sm:$0xff]
    %v289 = vld [vmem:[#allocation8 + $0x110] sm:$0xff]
    %v290 = vld [vmem:[#allocation8 + $0x118] sm:$0xff]
    %v291 = vld [vmem:[#allocation8 + $0x120] sm:$0xff]
    %v292 = vld [vmem:[#allocation8 + $0x128] sm:$0xff]
    %v293 = vld [vmem:[#allocation8 + $0x130] sm:$0xff]
    %v294 = vld [vmem:[#allocation8 + $0x138] sm:$0xff]
    %v295 = vld [vmem:[#allocation8 + $0x140] sm:$0xff]
    %v296 = vld [vmem:[#allocation8 + $0x148] sm:$0xff]
    %v297 = vld [vmem:[#allocation8 + $0x150] sm:$0xff]
    %v298 = vld [vmem:[#allocation8 + $0x158] sm:$0xff]
    %v299 = vld [vmem:[#allocation8 + $0x160] sm:$0xff]
    %v300 = vld [vmem:[#allocation8 + $0x168] sm:$0xff]
    %v301 = vld [vmem:[#allocation8 + $0x170] sm:$0xff]
    %v302 = vld [vmem:[#allocation8 + $0x178] sm:$0xff]
    %v303 = vld [vmem:[#allocation8 + $0x180] sm:$0xff]
    %v304 = vld [vmem:[#allocation8 + $0x188] sm:$0xff]
    %v305 = vld [vmem:[#allocation8 + $0x190] sm:$0xff]
    %v306 = vld [vmem:[#allocation8 + $0x198] sm:$0xff]
    %v307 = vld [vmem:[#allocation8 + $0x1a0] sm:$0xff]
    %v308 = vld [vmem:[#allocation8 + $0x1a8] sm:$0xff]
    %v309 = vld [vmem:[#allocation8 + $0x1b0] sm:$0xff]
    %v310 = vld [vmem:[#allocation8 + $0x1b8] sm:$0xff]
    %v311 = vld [vmem:[#allocation8 + $0x1c0] sm:$0xff]
    %v312 = vld [vmem:[#allocation8 + $0x1c8] sm:$0xff]
    %v313 = vld [vmem:[#allocation8 + $0x1d0] sm:$0xff]
    %v314 = vld [vmem:[#allocation8 + $0x1d8] sm:$0xff]
    %v315 = vld [vmem:[#allocation8 + $0x1e0] sm:$0xff]
    %v316 = vld [vmem:[#allocation8 + $0x1e8] sm:$0xff]
    %v317 = vld [vmem:[#allocation8 + $0x1f0] sm:$0xff]
    %v318 = vld [vmem:[#allocation8 + $0x1f8] sm:$0xff]
    %v319 = vld [vmem:[#allocation8 + $0x200] sm:$0xff]
    %v320 = vld [vmem:[#allocation8 + $0x208] sm:$0xff]
    %v321 = vld [vmem:[#allocation8 + $0x210] sm:$0xff]
    %v322 = vld [vmem:[#allocation8 + $0x218] sm:$0xff]
    %v323 = vld [vmem:[#allocation8 + $0x220] sm:$0xff]
    %v324 = vld [vmem:[#allocation8 + $0x228] sm:$0xff]
    %v325 = vld [vmem:[#allocation8 + $0x230] sm:$0xff]
    %v326 = vld [vmem:[#allocation8 + $0x238] sm:$0xff]
    %v327 = vld [vmem:[#allocation8 + $0x240] sm:$0xff]
    %v328 = vld [vmem:[#allocation8 + $0x248] sm:$0xff]
    %v329 = vld [vmem:[#allocation8 + $0x250] sm:$0xff]
    %v330 = vld [vmem:[#allocation8 + $0x258] sm:$0xff]
    %v331 = vld [vmem:[#allocation8 + $0x260] sm:$0xff]
    %v332 = vld [vmem:[#allocation8 + $0x268] sm:$0xff]
    %v333 = vld [vmem:[#allocation8 + $0x270] sm:$0xff]
    %v334 = vld [vmem:[#allocation8 + $0x278] sm:$0xff]
    %v335 = vld [vmem:[#allocation8 + $0x280] sm:$0xff]
    %v336 = vld [vmem:[#allocation8 + $0x288] sm:$0xff]
    %v337 = vld [vmem:[#allocation8 + $0x290] sm:$0xff]
    %v338 = vld [vmem:[#allocation8 + $0x298] sm:$0xff]
    %v339 = vld [vmem:[#allocation8 + $0x2a0] sm:$0xff]
    %v340 = vld [vmem:[#allocation8 + $0x2a8] sm:$0xff]
    %v341 = vld [vmem:[#allocation8 + $0x2b0] sm:$0xff]
    %v342 = vld [vmem:[#allocation8 + $0x2b8] sm:$0xff]
    %v343 = vld [vmem:[#allocation8 + $0x2c0] sm:$0xff]
    %v344 = vld [vmem:[#allocation8 + $0x2c8] sm:$0xff]
    %v345 = vld [vmem:[#allocation8 + $0x2d0] sm:$0xff]
    %v346 = vld [vmem:[#allocation8 + $0x2d8] sm:$0xff]
    %v347 = vld [vmem:[#allocation8 + $0x2e0] sm:$0xff]
    %v348 = vld [vmem:[#allocation8 + $0x2e8] sm:$0xff]
    %v349 = vld [vmem:[#allocation8 + $0x2f0] sm:$0xff]
    %v350 = vld [vmem:[#allocation8 + $0x2f8] sm:$0xff]
    %v351 = vld [vmem:[#allocation8 + $0x300] sm:$0xff]
    %v352 = vld [vmem:[#allocation8 + $0x308] sm:$0xff]
    %v353 = vld [vmem:[#allocation8 + $0x310] sm:$0xff]
    %v354 = vld [vmem:[#allocation8 + $0x318] sm:$0xff]
    %v355 = vld [vmem:[#allocation8 + $0x320] sm:$0xff]
    %v356 = vld [vmem:[#allocation8 + $0x328] sm:$0xff]
    %v357 = vld [vmem:[#allocation8 + $0x330] sm:$0xff]
    %v358 = vld [vmem:[#allocation8 + $0x338] sm:$0xff]
    %v359 = vld [vmem:[#allocation8 + $0x340] sm:$0xff]
    %v360 = vld [vmem:[#allocation8 + $0x348] sm:$0xff]
    %v361 = vld [vmem:[#allocation8 + $0x350] sm:$0xff]
    %v362 = vld [vmem:[#allocation8 + $0x358] sm:$0xff]
    %v363 = vld [vmem:[#allocation8 + $0x360] sm:$0xff]
    %v364 = vld [vmem:[#allocation8 + $0x368] sm:$0xff]
    %v365 = vld [vmem:[#allocation8 + $0x370] sm:$0xff]
    %v366 = vld [vmem:[#allocation8 + $0x378] sm:$0xff]
    %v367 = vld [vmem:[#allocation8 + $0x380] sm:$0xff]
    %v368 = vld [vmem:[#allocation8 + $0x388] sm:$0xff]
    %v369 = vld [vmem:[#allocation8 + $0x390] sm:$0xff]
    %v370 = vld [vmem:[#allocation8 + $0x398] sm:$0xff]
    %v371 = vld [vmem:[#allocation8 + $0x3a0] sm:$0xff]
    %v372 = vld [vmem:[#allocation8 + $0x3a8] sm:$0xff]
    %v373 = vld [vmem:[#allocation8 + $0x3b0] sm:$0xff]
    %v374 = vld [vmem:[#allocation8 + $0x3b8] sm:$0xff]
    %v375 = vld [vmem:[#allocation8 + $0x3c0] sm:$0xff]
    %v376 = vld [vmem:[#allocation8 + $0x3c8] sm:$0xff]
    %v377 = vld [vmem:[#allocation8 + $0x3d0] sm:$0xff]
    %v378 = vld [vmem:[#allocation8 + $0x3d8] sm:$0xff]
    %v379 = vld [vmem:[#allocation8 + $0x3e0] sm:$0xff]
    %v380 = vld [vmem:[#allocation8 + $0x3e8] sm:$0xff]
    %v381 = vld [vmem:[#allocation8 + $0x3f0] sm:$0xff]
    %v382 = vld [vmem:[#allocation8 + $0x3f8] sm:$0xff]
    %v383 = vld [vmem:[%s4] sm:$0xf]
    %v385 = vperm.slane %v383, 0
    %v386 = vperm.slane %v383, 1
    %v387 = vperm.slane %v383, 2
    %v388 = vperm.slane %v383, 3
    %v521 = vunpack.c.l.b16 %v255
    %v522 = vunpack.c.h.b16 %v255
    %v523 = vunpack.c.l.b16 %v256
    %v524 = vunpack.c.h.b16 %v256
    %v525 = vunpack.c.l.b16 %v257
    %v526 = vunpack.c.h.b16 %v257
    %v527 = vunpack.c.l.b16 %v258
    %v528 = vunpack.c.h.b16 %v258
    %v529 = vunpack.c.l.b16 %v259
    %v530 = vunpack.c.h.b16 %v259
    %v531 = vunpack.c.l.b16 %v260
    %v532 = vunpack.c.h.b16 %v260
    %v533 = vunpack.c.l.b16 %v261
    %v534 = vunpack.c.h.b16 %v261
    %v535 = vunpack.c.l.b16 %v262
    %v536 = vunpack.c.h.b16 %v262
    %v537 = vunpack.c.l.b16 %v263
    %v538 = vunpack.c.h.b16 %v263
    %v539 = vunpack.c.l.b16 %v264
    %v540 = vunpack.c.h.b16 %v264
    %v541 = vunpack.c.l.b16 %v265
    %v542 = vunpack.c.h.b16 %v265
    %v543 = vunpack.c.l.b16 %v266
    %v544 = vunpack.c.h.b16 %v266
    %v545 = vunpack.c.l.b16 %v267
    %v546 = vunpack.c.h.b16 %v267
    %v547 = vunpack.c.l.b16 %v268
    %v548 = vunpack.c.h.b16 %v268
    %v549 = vunpack.c.l.b16 %v269
    %v550 = vunpack.c.h.b16 %v269
    %v551 = vunpack.c.l.b16 %v270
    %v552 = vunpack.c.h.b16 %v270
    %v553 = vunpack.c.l.b16 %v271
    %v554 = vunpack.c.h.b16 %v271
    %v555 = vunpack.c.l.b16 %v272
    %v556 = vunpack.c.h.b16 %v272
    %v557 = vunpack.c.l.b16 %v273
    %v558 = vunpack.c.h.b16 %v273
    %v559 = vunpack.c.l.b16 %v274
    %v560 = vunpack.c.h.b16 %v274
    %v561 = vunpack.c.l.b16 %v275
    %v562 = vunpack.c.h.b16 %v275
    %v563 = vunpack.c.l.b16 %v276
    %v564 = vunpack.c.h.b16 %v276
    %v565 = vunpack.c.l.b16 %v277
    %v566 = vunpack.c.h.b16 %v277
    %v567 = vunpack.c.l.b16 %v278
    %v568 = vunpack.c.h.b16 %v278
    %v569 = vunpack.c.l.b16 %v279
    %v570 = vunpack.c.h.b16 %v279
    %v571 = vunpack.c.l.b16 %v280
    %v572 = vunpack.c.h.b16 %v280
    %v573 = vunpack.c.l.b16 %v281
    %v574 = vunpack.c.h.b16 %v281
    %v575 = vunpack.c.l.b16 %v282
    %v576 = vunpack.c.h.b16 %v282
    %v577 = vunpack.c.l.b16 %v283
    %v578 = vunpack.c.h.b16 %v283
    %v579 = vunpack.c.l.b16 %v284
    %v580 = vunpack.c.h.b16 %v284
    %v581 = vunpack.c.l.b16 %v285
    %v582 = vunpack.c.h.b16 %v285
    %v583 = vunpack.c.l.b16 %v286
    %v584 = vunpack.c.h.b16 %v286
    %v585 = vunpack.c.l.b16 %v287
    %v586 = vunpack.c.h.b16 %v287
    %v587 = vunpack.c.l.b16 %v288
    %v588 = vunpack.c.h.b16 %v288
    %v589 = vunpack.c.l.b16 %v289
    %v590 = vunpack.c.h.b16 %v289
    %v591 = vunpack.c.l.b16 %v290
    %v592 = vunpack.c.h.b16 %v290
    %v593 = vunpack.c.l.b16 %v291
    %v594 = vunpack.c.h.b16 %v291
    %v595 = vunpack.c.l.b16 %v292
    %v596 = vunpack.c.h.b16 %v292
    %v597 = vunpack.c.l.b16 %v293
    %v598 = vunpack.c.h.b16 %v293
    %v599 = vunpack.c.l.b16 %v294
    %v600 = vunpack.c.h.b16 %v294
    %v601 = vunpack.c.l.b16 %v295
    %v602 = vunpack.c.h.b16 %v295
    %v603 = vunpack.c.l.b16 %v296
    %v604 = vunpack.c.h.b16 %v296
    %v605 = vunpack.c.l.b16 %v297
    %v606 = vunpack.c.h.b16 %v297
    %v607 = vunpack.c.l.b16 %v298
    %v608 = vunpack.c.h.b16 %v298
    %v609 = vunpack.c.l.b16 %v299
    %v610 = vunpack.c.h.b16 %v299
    %v611 = vunpack.c.l.b16 %v300
    %v612 = vunpack.c.h.b16 %v300
    %v613 = vunpack.c.l.b16 %v301
    %v614 = vunpack.c.h.b16 %v301
    %v615 = vunpack.c.l.b16 %v302
    %v616 = vunpack.c.h.b16 %v302
    %v617 = vunpack.c.l.b16 %v303
    %v618 = vunpack.c.h.b16 %v303
    %v619 = vunpack.c.l.b16 %v304
    %v620 = vunpack.c.h.b16 %v304
    %v621 = vunpack.c.l.b16 %v305
    %v622 = vunpack.c.h.b16 %v305
    %v623 = vunpack.c.l.b16 %v306
    %v624 = vunpack.c.h.b16 %v306
    %v625 = vunpack.c.l.b16 %v307
    %v626 = vunpack.c.h.b16 %v307
    %v627 = vunpack.c.l.b16 %v308
    %v628 = vunpack.c.h.b16 %v308
    %v629 = vunpack.c.l.b16 %v309
    %v630 = vunpack.c.h.b16 %v309
    %v631 = vunpack.c.l.b16 %v310
    %v632 = vunpack.c.h.b16 %v310
    %v633 = vunpack.c.l.b16 %v311
    %v634 = vunpack.c.h.b16 %v311
    %v635 = vunpack.c.l.b16 %v312
    %v636 = vunpack.c.h.b16 %v312
    %v637 = vunpack.c.l.b16 %v313
    %v638 = vunpack.c.h.b16 %v313
    %v639 = vunpack.c.l.b16 %v314
    %v640 = vunpack.c.h.b16 %v314
    %v641 = vunpack.c.l.b16 %v315
    %v642 = vunpack.c.h.b16 %v315
    %v643 = vunpack.c.l.b16 %v316
    %v644 = vunpack.c.h.b16 %v316
    %v645 = vunpack.c.l.b16 %v317
    %v646 = vunpack.c.h.b16 %v317
    %v647 = vunpack.c.l.b16 %v318
    %v648 = vunpack.c.h.b16 %v318
    %v649 = vunpack.c.l.b16 %v319
    %v650 = vunpack.c.h.b16 %v319
    %v651 = vunpack.c.l.b16 %v320
    %v652 = vunpack.c.h.b16 %v320
    %v653 = vunpack.c.l.b16 %v321
    %v654 = vunpack.c.h.b16 %v321
    %v655 = vunpack.c.l.b16 %v322
    %v656 = vunpack.c.h.b16 %v322
    %v657 = vunpack.c.l.b16 %v323
    %v658 = vunpack.c.h.b16 %v323
    %v659 = vunpack.c.l.b16 %v324
    %v660 = vunpack.c.h.b16 %v324
    %v661 = vunpack.c.l.b16 %v325
    %v662 = vunpack.c.h.b16 %v325
    %v663 = vunpack.c.l.b16 %v326
    %v664 = vunpack.c.h.b16 %v326
    %v665 = vunpack.c.l.b16 %v327
    %v666 = vunpack.c.h.b16 %v327
    %v667 = vunpack.c.l.b16 %v328
    %v668 = vunpack.c.h.b16 %v328
    %v669 = vunpack.c.l.b16 %v329
    %v670 = vunpack.c.h.b16 %v329
    %v671 = vunpack.c.l.b16 %v330
    %v672 = vunpack.c.h.b16 %v330
    %v673 = vunpack.c.l.b16 %v331
    %v674 = vunpack.c.h.b16 %v331
    %v675 = vunpack.c.l.b16 %v332
    %v676 = vunpack.c.h.b16 %v332
    %v677 = vunpack.c.l.b16 %v333
    %v678 = vunpack.c.h.b16 %v333
    %v679 = vunpack.c.l.b16 %v334
    %v680 = vunpack.c.h.b16 %v334
    %v681 = vunpack.c.l.b16 %v335
    %v682 = vunpack.c.h.b16 %v335
    %v683 = vunpack.c.l.b16 %v336
    %v684 = vunpack.c.h.b16 %v336
    %v685 = vunpack.c.l.b16 %v337
    %v686 = vunpack.c.h.b16 %v337
    %v687 = vunpack.c.l.b16 %v338
    %v688 = vunpack.c.h.b16 %v338
    %v689 = vunpack.c.l.b16 %v339
    %v690 = vunpack.c.h.b16 %v339
    %v691 = vunpack.c.l.b16 %v340
    %v692 = vunpack.c.h.b16 %v340
    %v693 = vunpack.c.l.b16 %v341
    %v694 = vunpack.c.h.b16 %v341
    %v695 = vunpack.c.l.b16 %v342
    %v696 = vunpack.c.h.b16 %v342
    %v697 = vunpack.c.l.b16 %v343
    %v698 = vunpack.c.h.b16 %v343
    %v699 = vunpack.c.l.b16 %v344
    %v700 = vunpack.c.h.b16 %v344
    %v701 = vunpack.c.l.b16 %v345
    %v702 = vunpack.c.h.b16 %v345
    %v703 = vunpack.c.l.b16 %v346
    %v704 = vunpack.c.h.b16 %v346
    %v705 = vunpack.c.l.b16 %v347
    %v706 = vunpack.c.h.b16 %v347
    %v707 = vunpack.c.l.b16 %v348
    %v708 = vunpack.c.h.b16 %v348
    %v709 = vunpack.c.l.b16 %v349
    %v710 = vunpack.c.h.b16 %v349
    %v711 = vunpack.c.l.b16 %v350
    %v712 = vunpack.c.h.b16 %v350
    %v713 = vunpack.c.l.b16 %v351
    %v714 = vunpack.c.h.b16 %v351
    %v715 = vunpack.c.l.b16 %v352
    %v716 = vunpack.c.h.b16 %v352
    %v717 = vunpack.c.l.b16 %v353
    %v718 = vunpack.c.h.b16 %v353
    %v719 = vunpack.c.l.b16 %v354
    %v720 = vunpack.c.h.b16 %v354
    %v721 = vunpack.c.l.b16 %v355
    %v722 = vunpack.c.h.b16 %v355
    %v723 = vunpack.c.l.b16 %v356
    %v724 = vunpack.c.h.b16 %v356
    %v725 = vunpack.c.l.b16 %v357
    %v726 = vunpack.c.h.b16 %v357
    %v727 = vunpack.c.l.b16 %v358
    %v728 = vunpack.c.h.b16 %v358
    %v729 = vunpack.c.l.b16 %v359
    %v730 = vunpack.c.h.b16 %v359
    %v731 = vunpack.c.l.b16 %v360
    %v732 = vunpack.c.h.b16 %v360
    %v733 = vunpack.c.l.b16 %v361
    %v734 = vunpack.c.h.b16 %v361
    %v735 = vunpack.c.l.b16 %v362
    %v736 = vunpack.c.h.b16 %v362
    %v737 = vunpack.c.l.b16 %v363
    %v738 = vunpack.c.h.b16 %v363
    %v739 = vunpack.c.l.b16 %v364
    %v740 = vunpack.c.h.b16 %v364
    %v741 = vunpack.c.l.b16 %v365
    %v742 = vunpack.c.h.b16 %v365
    %v743 = vunpack.c.l.b16 %v366
    %v744 = vunpack.c.h.b16 %v366
    %v745 = vunpack.c.l.b16 %v367
    %v746 = vunpack.c.h.b16 %v367
    %v747 = vunpack.c.l.b16 %v368
    %v748 = vunpack.c.h.b16 %v368
    %v749 = vunpack.c.l.b16 %v369
    %v750 = vunpack.c.h.b16 %v369
    %v751 = vunpack.c.l.b16 %v370
    %v752 = vunpack.c.h.b16 %v370
    %v753 = vunpack.c.l.b16 %v371
    %v754 = vunpack.c.h.b16 %v371
    %v755 = vunpack.c.l.b16 %v372
    %v756 = vunpack.c.h.b16 %v372
    %v757 = vunpack.c.l.b16 %v373
    %v758 = vunpack.c.h.b16 %v373
    %v759 = vunpack.c.l.b16 %v374
    %v760 = vunpack.c.h.b16 %v374
    %v761 = vunpack.c.l.b16 %v375
    %v762 = vunpack.c.h.b16 %v375
    %v763 = vunpack.c.l.b16 %v376
    %v764 = vunpack.c.h.b16 %v376
    %v765 = vunpack.c.l.b16 %v377
    %v766 = vunpack.c.h.b16 %v377
    %v767 = vunpack.c.l.b16 %v378
    %v768 = vunpack.c.h.b16 %v378
    %v769 = vunpack.c.l.b16 %v379
    %v770 = vunpack.c.h.b16 %v379
    %v771 = vunpack.c.l.b16 %v380
    %v772 = vunpack.c.h.b16 %v380
    %v773 = vunpack.c.l.b16 %v381
    %v774 = vunpack.c.h.b16 %v381
    %v775 = vunpack.c.l.b16 %v382
    %v776 = vunpack.c.h.b16 %v382
    %v777 = vpack.c.b16 %v525, %v521
    %v778 = vpack.c.b16 %v526, %v522
    %v779 = vpack.c.b16 %v527, %v523
    %v780 = vpack.c.b16 %v528, %v524
    %v781 = vpack.c.b16 %v533, %v529
    %v782 = vpack.c.b16 %v534, %v530
    %v783 = vpack.c.b16 %v535, %v531
    %v784 = vpack.c.b16 %v536, %v532
    %v785 = vpack.c.b16 %v541, %v537
    %v786 = vpack.c.b16 %v542, %v538
    %v787 = vpack.c.b16 %v543, %v539
    %v788 = vpack.c.b16 %v544, %v540
    %v789 = vpack.c.b16 %v549, %v545
    %v790 = vpack.c.b16 %v550, %v546
    %v791 = vpack.c.b16 %v551, %v547
    %v792 = vpack.c.b16 %v552, %v548
    %v793 = vpack.c.b16 %v557, %v553
    %v794 = vpack.c.b16 %v558, %v554
    %v795 = vpack.c.b16 %v559, %v555
    %v796 = vpack.c.b16 %v560, %v556
    %v797 = vpack.c.b16 %v565, %v561
    %v798 = vpack.c.b16 %v566, %v562
    %v799 = vpack.c.b16 %v567, %v563
    %v800 = vpack.c.b16 %v568, %v564
    %v801 = vpack.c.b16 %v573, %v569
    %v802 = vpack.c.b16 %v574, %v570
    %v803 = vpack.c.b16 %v575, %v571
    %v804 = vpack.c.b16 %v576, %v572
    %v805 = vpack.c.b16 %v581, %v577
    %v806 = vpack.c.b16 %v582, %v578
    %v807 = vpack.c.b16 %v583, %v579
    %v808 = vpack.c.b16 %v584, %v580
    %v809 = vpack.c.b16 %v589, %v585
    %v810 = vpack.c.b16 %v590, %v586
    %v811 = vpack.c.b16 %v591, %v587
    %v812 = vpack.c.b16 %v592, %v588
    %v813 = vpack.c.b16 %v597, %v593
    %v814 = vpack.c.b16 %v598, %v594
    %v815 = vpack.c.b16 %v599, %v595
    %v816 = vpack.c.b16 %v600, %v596
    %v817 = vpack.c.b16 %v605, %v601
    %v818 = vpack.c.b16 %v606, %v602
    %v819 = vpack.c.b16 %v607, %v603
    %v820 = vpack.c.b16 %v608, %v604
    %v821 = vpack.c.b16 %v613, %v609
    %v822 = vpack.c.b16 %v614, %v610
    %v823 = vpack.c.b16 %v615, %v611
    %v824 = vpack.c.b16 %v616, %v612
    %v825 = vpack.c.b16 %v621, %v617
    %v826 = vpack.c.b16 %v622, %v618
    %v827 = vpack.c.b16 %v623, %v619
    %v828 = vpack.c.b16 %v624, %v620
    %v829 = vpack.c.b16 %v629, %v625
    %v830 = vpack.c.b16 %v630, %v626
    %v831 = vpack.c.b16 %v631, %v627
    %v832 = vpack.c.b16 %v632, %v628
    %v833 = vpack.c.b16 %v637, %v633
    %v834 = vpack.c.b16 %v638, %v634
    %v835 = vpack.c.b16 %v639, %v635
    %v836 = vpack.c.b16 %v640, %v636
    %v837 = vpack.c.b16 %v645, %v641
    %v838 = vpack.c.b16 %v646, %v642
    %v839 = vpack.c.b16 %v647, %v643
    %v840 = vpack.c.b16 %v648, %v644
    %v841 = vpack.c.b16 %v653, %v649
    %v842 = vpack.c.b16 %v654, %v650
    %v843 = vpack.c.b16 %v655, %v651
    %v844 = vpack.c.b16 %v656, %v652
    %v845 = vpack.c.b16 %v661, %v657
    %v846 = vpack.c.b16 %v662, %v658
    %v847 = vpack.c.b16 %v663, %v659
    %v848 = vpack.c.b16 %v664, %v660
    %v849 = vpack.c.b16 %v669, %v665
    %v850 = vpack.c.b16 %v670, %v666
    %v851 = vpack.c.b16 %v671, %v667
    %v852 = vpack.c.b16 %v672, %v668
    %v853 = vpack.c.b16 %v677, %v673
    %v854 = vpack.c.b16 %v678, %v674
    %v855 = vpack.c.b16 %v679, %v675
    %v856 = vpack.c.b16 %v680, %v676
    %v857 = vpack.c.b16 %v685, %v681
    %v858 = vpack.c.b16 %v686, %v682
    %v859 = vpack.c.b16 %v687, %v683
    %v860 = vpack.c.b16 %v688, %v684
    %v861 = vpack.c.b16 %v693, %v689
    %v862 = vpack.c.b16 %v694, %v690
    %v863 = vpack.c.b16 %v695, %v691
    %v864 = vpack.c.b16 %v696, %v692
    %v865 = vpack.c.b16 %v701, %v697
    %v866 = vpack.c.b16 %v702, %v698
    %v867 = vpack.c.b16 %v703, %v699
    %v868 = vpack.c.b16 %v704, %v700
    %v869 = vpack.c.b16 %v709, %v705
    %v870 = vpack.c.b16 %v710, %v706
    %v871 = vpack.c.b16 %v711, %v707
    %v872 = vpack.c.b16 %v712, %v708
    %v873 = vpack.c.b16 %v717, %v713
    %v874 = vpack.c.b16 %v718, %v714
    %v875 = vpack.c.b16 %v719, %v715
    %v876 = vpack.c.b16 %v720, %v716
    %v877 = vpack.c.b16 %v725, %v721
    %v878 = vpack.c.b16 %v726, %v722
    %v879 = vpack.c.b16 %v727, %v723
    %v880 = vpack.c.b16 %v728, %v724
    %v881 = vpack.c.b16 %v733, %v729
    %v882 = vpack.c.b16 %v734, %v730
    %v883 = vpack.c.b16 %v735, %v731
    %v884 = vpack.c.b16 %v736, %v732
    %v885 = vpack.c.b16 %v741, %v737
    %v886 = vpack.c.b16 %v742, %v738
    %v887 = vpack.c.b16 %v743, %v739
    %v888 = vpack.c.b16 %v744, %v740
    %v889 = vpack.c.b16 %v749, %v745
    %v890 = vpack.c.b16 %v750, %v746
    %v891 = vpack.c.b16 %v751, %v747
    %v892 = vpack.c.b16 %v752, %v748
    %v893 = vpack.c.b16 %v757, %v753
    %v894 = vpack.c.b16 %v758, %v754
    %v895 = vpack.c.b16 %v759, %v755
    %v896 = vpack.c.b16 %v760, %v756
    %v897 = vpack.c.b16 %v765, %v761
    %v898 = vpack.c.b16 %v766, %v762
    %v899 = vpack.c.b16 %v767, %v763
    %v900 = vpack.c.b16 %v768, %v764
    %v901 = vpack.c.b16 %v773, %v769
    %v902 = vpack.c.b16 %v774, %v770
    %v903 = vpack.c.b16 %v775, %v771
    %v904 = vpack.c.b16 %v776, %v772
    %1033 = vmatpush.bf16.msra.mxu0 %v805
    %1034 = vmatpush.bf16.msra.mxu0 %v801
    %1035 = vmatpush.bf16.msra.mxu0 %v797
    %1036 = vmatpush.bf16.msra.mxu0 %v793
    %1037 = vmatpush.bf16.msra.mxu0 %v789
    %1038 = vmatpush.bf16.msra.mxu0 %v785
    %1039 = vmatpush.bf16.msra.mxu0 %v781
    %1040 = vmatpush.bf16.msra.mxu0 %v777
    %1041 = vmatmul.bf16.gmra.mxu0 %v251
    %v1042 = vpop.f32.mrf.mxu0
    %v1043 = vadd.f32 %v385, %v1042
    %v1044 = vpop.f32.mrf.mxu0
    %1045 = vdwg.mxu0
    %1046 = vmatpush.bf16.msra.mxu0 %v837
    %1047 = vmatpush.bf16.msra.mxu0 %v833
    %1048 = vmatpush.bf16.msra.mxu0 %v829
    %1049 = vmatpush.bf16.msra.mxu0 %v825
    %1050 = vmatpush.bf16.msra.mxu0 %v821
    %1051 = vmatpush.bf16.msra.mxu0 %v817
    %1052 = vmatpush.bf16.msra.mxu0 %v813
    %1053 = vmatpush.bf16.msra.mxu0 %v809
    %1054 = vmatmul.bf16.gmra.mxu0 %v252
    %v1055 = vpop.f32.mrf.mxu0
    %v1056 = vadd.f32 %v1043, %v1055
    %v1057 = vpop.f32.mrf.mxu0
    %1058 = vdwg.mxu0
    %1059 = vmatpush.bf16.msra.mxu0 %v869
    %1060 = vmatpush.bf16.msra.mxu0 %v865
    %1061 = vmatpush.bf16.msra.mxu0 %v861
    %1062 = vmatpush.bf16.msra.mxu0 %v857
    %1063 = vmatpush.bf16.msra.mxu0 %v853
    %1064 = vmatpush.bf16.msra.mxu0 %v849
    %1065 = vmatpush.bf16.msra.mxu0 %v845
    %1066 = vmatpush.bf16.msra.mxu0 %v841
    %1067 = vmatmul.bf16.gmra.mxu0 %v253
    %v1068 = vpop.f32.mrf.mxu0
    %v1069 = vadd.f32 %v1056, %v1068
    %v1070 = vpop.f32.mrf.mxu0
    %1071 = vdwg.mxu0
    %1072 = vmatpush.bf16.msra.mxu0 %v901
    %1073 = vmatpush.bf16.msra.mxu0 %v897
    %1074 = vmatpush.bf16.msra.mxu0 %v893
    %1075 = vmatpush.bf16.msra.mxu0 %v889
    %1076 = vmatpush.bf16.msra.mxu0 %v885
    %1077 = vmatpush.bf16.msra.mxu0 %v881
    %1078 = vmatpush.bf16.msra.mxu0 %v877
    %1079 = vmatpush.bf16.msra.mxu0 %v873
    %1080 = vmatmul.bf16.gmra.mxu0 %v254
    %v1081 = vpop.f32.mrf.mxu0
    %v1082 = vadd.f32 %v1069, %v1081
    %v1083 = vpop.f32.mrf.mxu0
    %1084 = vdwg.mxu0
    %1085 = vmatpush.bf16.msra.mxu0 %v806
    %1086 = vmatpush.bf16.msra.mxu0 %v802
    %1087 = vmatpush.bf16.msra.mxu0 %v798
    %1088 = vmatpush.bf16.msra.mxu0 %v794
    %1089 = vmatpush.bf16.msra.mxu0 %v790
    %1090 = vmatpush.bf16.msra.mxu0 %v786
    %1091 = vmatpush.bf16.msra.mxu0 %v782
    %1092 = vmatpush.bf16.msra.mxu0 %v778
    %1093 = vmatmul.bf16.gmra.mxu0 %v251
    %v1094 = vpop.f32.mrf.mxu0
    %v1095 = vadd.f32 %v386, %v1094
    %v1096 = vpop.f32.mrf.mxu0
    %1097 = vdwg.mxu0
    %1098 = vmatpush.bf16.msra.mxu0 %v838
    %1099 = vmatpush.bf16.msra.mxu0 %v834
    %1100 = vmatpush.bf16.msra.mxu0 %v830
    %1101 = vmatpush.bf16.msra.mxu0 %v826
    %1102 = vmatpush.bf16.msra.mxu0 %v822
    %1103 = vmatpush.bf16.msra.mxu0 %v818
    %1104 = vmatpush.bf16.msra.mxu0 %v814
    %1105 = vmatpush.bf16.msra.mxu0 %v810
    %1106 = vmatmul.bf16.gmra.mxu0 %v252
    %v1107 = vpop.f32.mrf.mxu0
    %v1108 = vadd.f32 %v1095, %v1107
    %v1109 = vpop.f32.mrf.mxu0
    %1110 = vdwg.mxu0
    %1111 = vmatpush.bf16.msra.mxu0 %v870
    %1112 = vmatpush.bf16.msra.mxu0 %v866
    %1113 = vmatpush.bf16.msra.mxu0 %v862
    %1114 = vmatpush.bf16.msra.mxu0 %v858
    %1115 = vmatpush.bf16.msra.mxu0 %v854
    %1116 = vmatpush.bf16.msra.mxu0 %v850
    %1117 = vmatpush.bf16.msra.mxu0 %v846
    %1118 = vmatpush.bf16.msra.mxu0 %v842
    %1119 = vmatmul.bf16.gmra.mxu0 %v253
    %v1120 = vpop.f32.mrf.mxu0
    %v1121 = vadd.f32 %v1108, %v1120
    %v1122 = vpop.f32.mrf.mxu0
    %1123 = vdwg.mxu0
    %1124 = vmatpush.bf16.msra.mxu0 %v902
    %1125 = vmatpush.bf16.msra.mxu0 %v898
    %1126 = vmatpush.bf16.msra.mxu0 %v894
    %1127 = vmatpush.bf16.msra.mxu0 %v890
    %1128 = vmatpush.bf16.msra.mxu0 %v886
    %1129 = vmatpush.bf16.msra.mxu0 %v882
    %1130 = vmatpush.bf16.msra.mxu0 %v878
    %1131 = vmatpush.bf16.msra.mxu0 %v874
    %1132 = vmatmul.bf16.gmra.mxu0 %v254
    %v1133 = vpop.f32.mrf.mxu0
    %v1134 = vadd.f32 %v1121, %v1133
    %v1135 = vpop.f32.mrf.mxu0
    %1136 = vdwg.mxu0
    %1137 = vmatpush.bf16.msra.mxu0 %v807
    %1138 = vmatpush.bf16.msra.mxu0 %v803
    %1139 = vmatpush.bf16.msra.mxu0 %v799
    %1140 = vmatpush.bf16.msra.mxu0 %v795
    %1141 = vmatpush.bf16.msra.mxu0 %v791
    %1142 = vmatpush.bf16.msra.mxu0 %v787
    %1143 = vmatpush.bf16.msra.mxu0 %v783
    %1144 = vmatpush.bf16.msra.mxu0 %v779
    %1145 = vmatmul.bf16.gmra.mxu0 %v251
    %v1146 = vpop.f32.mrf.mxu0
    %v1147 = vadd.f32 %v387, %v1146
    %v1148 = vpop.f32.mrf.mxu0
    %1149 = vdwg.mxu0
    %1150 = vmatpush.bf16.msra.mxu0 %v839
    %1151 = vmatpush.bf16.msra.mxu0 %v835
    %1152 = vmatpush.bf16.msra.mxu0 %v831
    %1153 = vmatpush.bf16.msra.mxu0 %v827
    %1154 = vmatpush.bf16.msra.mxu0 %v823
    %1155 = vmatpush.bf16.msra.mxu0 %v819
    %1156 = vmatpush.bf16.msra.mxu0 %v815
    %1157 = vmatpush.bf16.msra.mxu0 %v811
    %1158 = vmatmul.bf16.gmra.mxu0 %v252
    %v1159 = vpop.f32.mrf.mxu0
    %v1160 = vadd.f32 %v1147, %v1159
    %v1161 = vpop.f32.mrf.mxu0
    %1162 = vdwg.mxu0
    %1163 = vmatpush.bf16.msra.mxu0 %v871
    %1164 = vmatpush.bf16.msra.mxu0 %v867
    %1165 = vmatpush.bf16.msra.mxu0 %v863
    %1166 = vmatpush.bf16.msra.mxu0 %v859
    %1167 = vmatpush.bf16.msra.mxu0 %v855
    %1168 = vmatpush.bf16.msra.mxu0 %v851
    %1169 = vmatpush.bf16.msra.mxu0 %v847
    %1170 = vmatpush.bf16.msra.mxu0 %v843
    %1171 = vmatmul.bf16.gmra.mxu0 %v253
    %v1172 = vpop.f32.mrf.mxu0
    %v1173 = vadd.f32 %v1160, %v1172
    %v1174 = vpop.f32.mrf.mxu0
    %1175 = vdwg.mxu0
    %1176 = vmatpush.bf16.msra.mxu0 %v903
    %1177 = vmatpush.bf16.msra.mxu0 %v899
    %1178 = vmatpush.bf16.msra.mxu0 %v895
    %1179 = vmatpush.bf16.msra.mxu0 %v891
    %1180 = vmatpush.bf16.msra.mxu0 %v887
    %1181 = vmatpush.bf16.msra.mxu0 %v883
    %1182 = vmatpush.bf16.msra.mxu0 %v879
    %1183 = vmatpush.bf16.msra.mxu0 %v875
    %1184 = vmatmul.bf16.gmra.mxu0 %v254
    %v1185 = vpop.f32.mrf.mxu0
    %v1186 = vadd.f32 %v1173, %v1185
    %v1187 = vpop.f32.mrf.mxu0
    %1188 = vdwg.mxu0
    %1189 = vmatpush.bf16.msra.mxu0 %v808
    %1190 = vmatpush.bf16.msra.mxu0 %v804
    %1191 = vmatpush.bf16.msra.mxu0 %v800
    %1192 = vmatpush.bf16.msra.mxu0 %v796
    %1193 = vmatpush.bf16.msra.mxu0 %v792
    %1194 = vmatpush.bf16.msra.mxu0 %v788
    %1195 = vmatpush.bf16.msra.mxu0 %v784
    %1196 = vmatpush.bf16.msra.mxu0 %v780
    %1197 = vmatmul.bf16.gmra.mxu0 %v251
    %v1198 = vpop.f32.mrf.mxu0
    %v1199 = vadd.f32 %v388, %v1198
    %v1200 = vpop.f32.mrf.mxu0
    %1201 = vdwg.mxu0
    %1202 = vmatpush.bf16.msra.mxu0 %v840
    %1203 = vmatpush.bf16.msra.mxu0 %v836
    %1204 = vmatpush.bf16.msra.mxu0 %v832
    %1205 = vmatpush.bf16.msra.mxu0 %v828
    %1206 = vmatpush.bf16.msra.mxu0 %v824
    %1207 = vmatpush.bf16.msra.mxu0 %v820
    %1208 = vmatpush.bf16.msra.mxu0 %v816
    %1209 = vmatpush.bf16.msra.mxu0 %v812
    %1210 = vmatmul.bf16.gmra.mxu0 %v252
    %v1211 = vpop.f32.mrf.mxu0
    %v1212 = vadd.f32 %v1199, %v1211
    %v1213 = vpop.f32.mrf.mxu0
    %1214 = vdwg.mxu0
    %1215 = vmatpush.bf16.msra.mxu0 %v872
    %1216 = vmatpush.bf16.msra.mxu0 %v868
    %1217 = vmatpush.bf16.msra.mxu0 %v864
    %1218 = vmatpush.bf16.msra.mxu0 %v860
    %1219 = vmatpush.bf16.msra.mxu0 %v856
    %1220 = vmatpush.bf16.msra.mxu0 %v852
    %1221 = vmatpush.bf16.msra.mxu0 %v848
    %1222 = vmatpush.bf16.msra.mxu0 %v844
    %1223 = vmatmul.bf16.gmra.mxu0 %v253
    %v1224 = vpop.f32.mrf.mxu0
    %v1225 = vadd.f32 %v1212, %v1224
    %v1226 = vpop.f32.mrf.mxu0
    %1227 = vdwg.mxu0
    %1228 = vmatpush.bf16.msra.mxu0 %v904
    %1229 = vmatpush.bf16.msra.mxu0 %v900
    %1230 = vmatpush.bf16.msra.mxu0 %v896
    %1231 = vmatpush.bf16.msra.mxu0 %v892
    %1232 = vmatpush.bf16.msra.mxu0 %v888
    %1233 = vmatpush.bf16.msra.mxu0 %v884
    %1234 = vmatpush.bf16.msra.mxu0 %v880
    %1235 = vmatpush.bf16.msra.mxu0 %v876
    %1236 = vmatmul.bf16.gmra.mxu0 %v254
    %v1237 = vpop.f32.mrf.mxu0
    %v1238 = vadd.f32 %v1225, %v1237
    %v1239 = vpop.f32.mrf.mxu0
    %1240 = vdwg.mxu0
    %v1241 = vmax.f32 %v1082, 0.0
    %v1242 = vmax.f32 %v1134, 0.0
    %v1243 = vmax.f32 %v1186, 0.0
    %v1244 = vmax.f32 %v1238, 0.0
    %v1245 = vpack.c.bf16 %v1241, %v1241
    %v1246 = vpack.c.bf16 %v1242, %v1242
    %v1247 = vpack.c.bf16 %v1243, %v1243
    %v1248 = vpack.c.bf16 %v1244, %v1244
    %v1249 = vld [vmem:[#allocation10] sm:$0xff]
    %v1250 = vld [vmem:[#allocation10 + $0x8] sm:$0xff]
    %v1251 = vld [vmem:[#allocation10 + $0x10] sm:$0xff]
    %v1252 = vld [vmem:[#allocation10 + $0x18] sm:$0xff]
    %v1253 = vld [vmem:[#allocation10 + $0x20] sm:$0xff]
    %v1254 = vld [vmem:[#allocation10 + $0x28] sm:$0xff]
    %v1255 = vld [vmem:[#allocation10 + $0x30] sm:$0xff]
    %v1256 = vld [vmem:[#allocation10 + $0x38] sm:$0xff]
    %v1257 = vld [vmem:[#allocation10 + $0x40] sm:$0xff]
    %v1258 = vld [vmem:[#allocation10 + $0x48] sm:$0xff]
    %v1259 = vld [vmem:[#allocation10 + $0x50] sm:$0xff]
    %v1260 = vld [vmem:[#allocation10 + $0x58] sm:$0xff]
    %v1261 = vld [vmem:[#allocation10 + $0x60] sm:$0xff]
    %v1262 = vld [vmem:[#allocation10 + $0x68] sm:$0xff]
    %v1263 = vld [vmem:[#allocation10 + $0x70] sm:$0xff]
    %v1264 = vld [vmem:[#allocation10 + $0x78] sm:$0xff]
    %v1265 = vld [vmem:[#allocation10 + $0x80] sm:$0xff]
    %v1266 = vld [vmem:[#allocation10 + $0x88] sm:$0xff]
    %v1267 = vld [vmem:[#allocation10 + $0x90] sm:$0xff]
    %v1268 = vld [vmem:[#allocation10 + $0x98] sm:$0xff]
    %v1269 = vld [vmem:[#allocation10 + $0xa0] sm:$0xff]
    %v1270 = vld [vmem:[#allocation10 + $0xa8] sm:$0xff]
    %v1271 = vld [vmem:[#allocation10 + $0xb0] sm:$0xff]
    %v1272 = vld [vmem:[#allocation10 + $0xb8] sm:$0xff]
    %v1273 = vld [vmem:[#allocation10 + $0xc0] sm:$0xff]
    %v1274 = vld [vmem:[#allocation10 + $0xc8] sm:$0xff]
    %v1275 = vld [vmem:[#allocation10 + $0xd0] sm:$0xff]
    %v1276 = vld [vmem:[#allocation10 + $0xd8] sm:$0xff]
    %v1277 = vld [vmem:[#allocation10 + $0xe0] sm:$0xff]
    %v1278 = vld [vmem:[#allocation10 + $0xe8] sm:$0xff]
    %v1279 = vld [vmem:[#allocation10 + $0xf0] sm:$0xff]
    %v1280 = vld [vmem:[#allocation10 + $0xf8] sm:$0xff]
    %v1281 = vld [vmem:[#allocation10 + $0x100] sm:$0xff]
    %v1282 = vld [vmem:[#allocation10 + $0x108] sm:$0xff]
    %v1283 = vld [vmem:[#allocation10 + $0x110] sm:$0xff]
    %v1284 = vld [vmem:[#allocation10 + $0x118] sm:$0xff]
    %v1285 = vld [vmem:[#allocation10 + $0x120] sm:$0xff]
    %v1286 = vld [vmem:[#allocation10 + $0x128] sm:$0xff]
    %v1287 = vld [vmem:[#allocation10 + $0x130] sm:$0xff]
    %v1288 = vld [vmem:[#allocation10 + $0x138] sm:$0xff]
    %v1289 = vld [vmem:[#allocation10 + $0x140] sm:$0xff]
    %v1290 = vld [vmem:[#allocation10 + $0x148] sm:$0xff]
    %v1291 = vld [vmem:[#allocation10 + $0x150] sm:$0xff]
    %v1292 = vld [vmem:[#allocation10 + $0x158] sm:$0xff]
    %v1293 = vld [vmem:[#allocation10 + $0x160] sm:$0xff]
    %v1294 = vld [vmem:[#allocation10 + $0x168] sm:$0xff]
    %v1295 = vld [vmem:[#allocation10 + $0x170] sm:$0xff]
    %v1296 = vld [vmem:[#allocation10 + $0x178] sm:$0xff]
    %v1297 = vld [vmem:[#allocation10 + $0x180] sm:$0xff]
    %v1298 = vld [vmem:[#allocation10 + $0x188] sm:$0xff]
    %v1299 = vld [vmem:[#allocation10 + $0x190] sm:$0xff]
    %v1300 = vld [vmem:[#allocation10 + $0x198] sm:$0xff]
    %v1301 = vld [vmem:[#allocation10 + $0x1a0] sm:$0xff]
    %v1302 = vld [vmem:[#allocation10 + $0x1a8] sm:$0xff]
    %v1303 = vld [vmem:[#allocation10 + $0x1b0] sm:$0xff]
    %v1304 = vld [vmem:[#allocation10 + $0x1b8] sm:$0xff]
    %v1305 = vld [vmem:[#allocation10 + $0x1c0] sm:$0xff]
    %v1306 = vld [vmem:[#allocation10 + $0x1c8] sm:$0xff]
    %v1307 = vld [vmem:[#allocation10 + $0x1d0] sm:$0xff]
    %v1308 = vld [vmem:[#allocation10 + $0x1d8] sm:$0xff]
    %v1309 = vld [vmem:[#allocation10 + $0x1e0] sm:$0xff]
    %v1310 = vld [vmem:[#allocation10 + $0x1e8] sm:$0xff]
    %v1311 = vld [vmem:[#allocation10 + $0x1f0] sm:$0xff]
    %v1312 = vld [vmem:[#allocation10 + $0x1f8] sm:$0xff]
    %v1313 = vld [vmem:[#allocation10 + $0x200] sm:$0xff]
    %v1314 = vld [vmem:[#allocation10 + $0x208] sm:$0xff]
    %v1315 = vld [vmem:[#allocation10 + $0x210] sm:$0xff]
    %v1316 = vld [vmem:[#allocation10 + $0x218] sm:$0xff]
    %v1317 = vld [vmem:[#allocation10 + $0x220] sm:$0xff]
    %v1318 = vld [vmem:[#allocation10 + $0x228] sm:$0xff]
    %v1319 = vld [vmem:[#allocation10 + $0x230] sm:$0xff]
    %v1320 = vld [vmem:[#allocation10 + $0x238] sm:$0xff]
    %v1321 = vld [vmem:[#allocation10 + $0x240] sm:$0xff]
    %v1322 = vld [vmem:[#allocation10 + $0x248] sm:$0xff]
    %v1323 = vld [vmem:[#allocation10 + $0x250] sm:$0xff]
    %v1324 = vld [vmem:[#allocation10 + $0x258] sm:$0xff]
    %v1325 = vld [vmem:[#allocation10 + $0x260] sm:$0xff]
    %v1326 = vld [vmem:[#allocation10 + $0x268] sm:$0xff]
    %v1327 = vld [vmem:[#allocation10 + $0x270] sm:$0xff]
    %v1328 = vld [vmem:[#allocation10 + $0x278] sm:$0xff]
    %v1329 = vld [vmem:[#allocation10 + $0x280] sm:$0xff]
    %v1330 = vld [vmem:[#allocation10 + $0x288] sm:$0xff]
    %v1331 = vld [vmem:[#allocation10 + $0x290] sm:$0xff]
    %v1332 = vld [vmem:[#allocation10 + $0x298] sm:$0xff]
    %v1333 = vld [vmem:[#allocation10 + $0x2a0] sm:$0xff]
    %v1334 = vld [vmem:[#allocation10 + $0x2a8] sm:$0xff]
    %v1335 = vld [vmem:[#allocation10 + $0x2b0] sm:$0xff]
    %v1336 = vld [vmem:[#allocation10 + $0x2b8] sm:$0xff]
    %v1337 = vld [vmem:[#allocation10 + $0x2c0] sm:$0xff]
    %v1338 = vld [vmem:[#allocation10 + $0x2c8] sm:$0xff]
    %v1339 = vld [vmem:[#allocation10 + $0x2d0] sm:$0xff]
    %v1340 = vld [vmem:[#allocation10 + $0x2d8] sm:$0xff]
    %v1341 = vld [vmem:[#allocation10 + $0x2e0] sm:$0xff]
    %v1342 = vld [vmem:[#allocation10 + $0x2e8] sm:$0xff]
    %v1343 = vld [vmem:[#allocation10 + $0x2f0] sm:$0xff]
    %v1344 = vld [vmem:[#allocation10 + $0x2f8] sm:$0xff]
    %v1345 = vld [vmem:[#allocation10 + $0x300] sm:$0xff]
    %v1346 = vld [vmem:[#allocation10 + $0x308] sm:$0xff]
    %v1347 = vld [vmem:[#allocation10 + $0x310] sm:$0xff]
    %v1348 = vld [vmem:[#allocation10 + $0x318] sm:$0xff]
    %v1349 = vld [vmem:[#allocation10 + $0x320] sm:$0xff]
    %v1350 = vld [vmem:[#allocation10 + $0x328] sm:$0xff]
    %v1351 = vld [vmem:[#allocation10 + $0x330] sm:$0xff]
    %v1352 = vld [vmem:[#allocation10 + $0x338] sm:$0xff]
    %v1353 = vld [vmem:[#allocation10 + $0x340] sm:$0xff]
    %v1354 = vld [vmem:[#allocation10 + $0x348] sm:$0xff]
    %v1355 = vld [vmem:[#allocation10 + $0x350] sm:$0xff]
    %v1356 = vld [vmem:[#allocation10 + $0x358] sm:$0xff]
    %v1357 = vld [vmem:[#allocation10 + $0x360] sm:$0xff]
    %v1358 = vld [vmem:[#allocation10 + $0x368] sm:$0xff]
    %v1359 = vld [vmem:[#allocation10 + $0x370] sm:$0xff]
    %v1360 = vld [vmem:[#allocation10 + $0x378] sm:$0xff]
    %v1361 = vld [vmem:[#allocation10 + $0x380] sm:$0xff]
    %v1362 = vld [vmem:[#allocation10 + $0x388] sm:$0xff]
    %v1363 = vld [vmem:[#allocation10 + $0x390] sm:$0xff]
    %v1364 = vld [vmem:[#allocation10 + $0x398] sm:$0xff]
    %v1365 = vld [vmem:[#allocation10 + $0x3a0] sm:$0xff]
    %v1366 = vld [vmem:[#allocation10 + $0x3a8] sm:$0xff]
    %v1367 = vld [vmem:[#allocation10 + $0x3b0] sm:$0xff]
    %v1368 = vld [vmem:[#allocation10 + $0x3b8] sm:$0xff]
    %v1369 = vld [vmem:[#allocation10 + $0x3c0] sm:$0xff]
    %v1370 = vld [vmem:[#allocation10 + $0x3c8] sm:$0xff]
    %v1371 = vld [vmem:[#allocation10 + $0x3d0] sm:$0xff]
    %v1372 = vld [vmem:[#allocation10 + $0x3d8] sm:$0xff]
    %v1373 = vld [vmem:[#allocation10 + $0x3e0] sm:$0xff]
    %v1374 = vld [vmem:[#allocation10 + $0x3e8] sm:$0xff]
    %v1375 = vld [vmem:[#allocation10 + $0x3f0] sm:$0xff]
    %v1376 = vld [vmem:[#allocation10 + $0x3f8] sm:$0xff]
    %v1377 = vld [vmem:[#allocation11] sm:$0xf]
    %v1379 = vperm.slane %v1377, 0
    %v1380 = vperm.slane %v1377, 1
    %v1381 = vperm.slane %v1377, 2
    %v1382 = vperm.slane %v1377, 3
    %v1515 = vunpack.c.l.b16 %v1249
    %v1516 = vunpack.c.h.b16 %v1249
    %v1517 = vunpack.c.l.b16 %v1250
    %v1518 = vunpack.c.h.b16 %v1250
    %v1519 = vunpack.c.l.b16 %v1251
    %v1520 = vunpack.c.h.b16 %v1251
    %v1521 = vunpack.c.l.b16 %v1252
    %v1522 = vunpack.c.h.b16 %v1252
    %v1523 = vunpack.c.l.b16 %v1253
    %v1524 = vunpack.c.h.b16 %v1253
    %v1525 = vunpack.c.l.b16 %v1254
    %v1526 = vunpack.c.h.b16 %v1254
    %v1527 = vunpack.c.l.b16 %v1255
    %v1528 = vunpack.c.h.b16 %v1255
    %v1529 = vunpack.c.l.b16 %v1256
    %v1530 = vunpack.c.h.b16 %v1256
    %v1531 = vunpack.c.l.b16 %v1257
    %v1532 = vunpack.c.h.b16 %v1257
    %v1533 = vunpack.c.l.b16 %v1258
    %v1534 = vunpack.c.h.b16 %v1258
    %v1535 = vunpack.c.l.b16 %v1259
    %v1536 = vunpack.c.h.b16 %v1259
    %v1537 = vunpack.c.l.b16 %v1260
    %v1538 = vunpack.c.h.b16 %v1260
    %v1539 = vunpack.c.l.b16 %v1261
    %v1540 = vunpack.c.h.b16 %v1261
    %v1541 = vunpack.c.l.b16 %v1262
    %v1542 = vunpack.c.h.b16 %v1262
    %v1543 = vunpack.c.l.b16 %v1263
    %v1544 = vunpack.c.h.b16 %v1263
    %v1545 = vunpack.c.l.b16 %v1264
    %v1546 = vunpack.c.h.b16 %v1264
    %v1547 = vunpack.c.l.b16 %v1265
    %v1548 = vunpack.c.h.b16 %v1265
    %v1549 = vunpack.c.l.b16 %v1266
    %v1550 = vunpack.c.h.b16 %v1266
    %v1551 = vunpack.c.l.b16 %v1267
    %v1552 = vunpack.c.h.b16 %v1267
    %v1553 = vunpack.c.l.b16 %v1268
    %v1554 = vunpack.c.h.b16 %v1268
    %v1555 = vunpack.c.l.b16 %v1269
    %v1556 = vunpack.c.h.b16 %v1269
    %v1557 = vunpack.c.l.b16 %v1270
    %v1558 = vunpack.c.h.b16 %v1270
    %v1559 = vunpack.c.l.b16 %v1271
    %v1560 = vunpack.c.h.b16 %v1271
    %v1561 = vunpack.c.l.b16 %v1272
    %v1562 = vunpack.c.h.b16 %v1272
    %v1563 = vunpack.c.l.b16 %v1273
    %v1564 = vunpack.c.h.b16 %v1273
    %v1565 = vunpack.c.l.b16 %v1274
    %v1566 = vunpack.c.h.b16 %v1274
    %v1567 = vunpack.c.l.b16 %v1275
    %v1568 = vunpack.c.h.b16 %v1275
    %v1569 = vunpack.c.l.b16 %v1276
    %v1570 = vunpack.c.h.b16 %v1276
    %v1571 = vunpack.c.l.b16 %v1277
    %v1572 = vunpack.c.h.b16 %v1277
    %v1573 = vunpack.c.l.b16 %v1278
    %v1574 = vunpack.c.h.b16 %v1278
    %v1575 = vunpack.c.l.b16 %v1279
    %v1576 = vunpack.c.h.b16 %v1279
    %v1577 = vunpack.c.l.b16 %v1280
    %v1578 = vunpack.c.h.b16 %v1280
    %v1579 = vunpack.c.l.b16 %v1281
    %v1580 = vunpack.c.h.b16 %v1281
    %v1581 = vunpack.c.l.b16 %v1282
    %v1582 = vunpack.c.h.b16 %v1282
    %v1583 = vunpack.c.l.b16 %v1283
    %v1584 = vunpack.c.h.b16 %v1283
    %v1585 = vunpack.c.l.b16 %v1284
    %v1586 = vunpack.c.h.b16 %v1284
    %v1587 = vunpack.c.l.b16 %v1285
    %v1588 = vunpack.c.h.b16 %v1285
    %v1589 = vunpack.c.l.b16 %v1286
    %v1590 = vunpack.c.h.b16 %v1286
    %v1591 = vunpack.c.l.b16 %v1287
    %v1592 = vunpack.c.h.b16 %v1287
    %v1593 = vunpack.c.l.b16 %v1288
    %v1594 = vunpack.c.h.b16 %v1288
    %v1595 = vunpack.c.l.b16 %v1289
    %v1596 = vunpack.c.h.b16 %v1289
    %v1597 = vunpack.c.l.b16 %v1290
    %v1598 = vunpack.c.h.b16 %v1290
    %v1599 = vunpack.c.l.b16 %v1291
    %v1600 = vunpack.c.h.b16 %v1291
    %v1601 = vunpack.c.l.b16 %v1292
    %v1602 = vunpack.c.h.b16 %v1292
    %v1603 = vunpack.c.l.b16 %v1293
    %v1604 = vunpack.c.h.b16 %v1293
    %v1605 = vunpack.c.l.b16 %v1294
    %v1606 = vunpack.c.h.b16 %v1294
    %v1607 = vunpack.c.l.b16 %v1295
    %v1608 = vunpack.c.h.b16 %v1295
    %v1609 = vunpack.c.l.b16 %v1296
    %v1610 = vunpack.c.h.b16 %v1296
    %v1611 = vunpack.c.l.b16 %v1297
    %v1612 = vunpack.c.h.b16 %v1297
    %v1613 = vunpack.c.l.b16 %v1298
    %v1614 = vunpack.c.h.b16 %v1298
    %v1615 = vunpack.c.l.b16 %v1299
    %v1616 = vunpack.c.h.b16 %v1299
    %v1617 = vunpack.c.l.b16 %v1300
    %v1618 = vunpack.c.h.b16 %v1300
    %v1619 = vunpack.c.l.b16 %v1301
    %v1620 = vunpack.c.h.b16 %v1301
    %v1621 = vunpack.c.l.b16 %v1302
    %v1622 = vunpack.c.h.b16 %v1302
    %v1623 = vunpack.c.l.b16 %v1303
    %v1624 = vunpack.c.h.b16 %v1303
    %v1625 = vunpack.c.l.b16 %v1304
    %v1626 = vunpack.c.h.b16 %v1304
    %v1627 = vunpack.c.l.b16 %v1305
    %v1628 = vunpack.c.h.b16 %v1305
    %v1629 = vunpack.c.l.b16 %v1306
    %v1630 = vunpack.c.h.b16 %v1306
    %v1631 = vunpack.c.l.b16 %v1307
    %v1632 = vunpack.c.h.b16 %v1307
    %v1633 = vunpack.c.l.b16 %v1308
    %v1634 = vunpack.c.h.b16 %v1308
    %v1635 = vunpack.c.l.b16 %v1309
    %v1636 = vunpack.c.h.b16 %v1309
    %v1637 = vunpack.c.l.b16 %v1310
    %v1638 = vunpack.c.h.b16 %v1310
    %v1639 = vunpack.c.l.b16 %v1311
    %v1640 = vunpack.c.h.b16 %v1311
    %v1641 = vunpack.c.l.b16 %v1312
    %v1642 = vunpack.c.h.b16 %v1312
    %v1643 = vunpack.c.l.b16 %v1313
    %v1644 = vunpack.c.h.b16 %v1313
    %v1645 = vunpack.c.l.b16 %v1314
    %v1646 = vunpack.c.h.b16 %v1314
    %v1647 = vunpack.c.l.b16 %v1315
    %v1648 = vunpack.c.h.b16 %v1315
    %v1649 = vunpack.c.l.b16 %v1316
    %v1650 = vunpack.c.h.b16 %v1316
    %v1651 = vunpack.c.l.b16 %v1317
    %v1652 = vunpack.c.h.b16 %v1317
    %v1653 = vunpack.c.l.b16 %v1318
    %v1654 = vunpack.c.h.b16 %v1318
    %v1655 = vunpack.c.l.b16 %v1319
    %v1656 = vunpack.c.h.b16 %v1319
    %v1657 = vunpack.c.l.b16 %v1320
    %v1658 = vunpack.c.h.b16 %v1320
    %v1659 = vunpack.c.l.b16 %v1321
    %v1660 = vunpack.c.h.b16 %v1321
    %v1661 = vunpack.c.l.b16 %v1322
    %v1662 = vunpack.c.h.b16 %v1322
    %v1663 = vunpack.c.l.b16 %v1323
    %v1664 = vunpack.c.h.b16 %v1323
    %v1665 = vunpack.c.l.b16 %v1324
    %v1666 = vunpack.c.h.b16 %v1324
    %v1667 = vunpack.c.l.b16 %v1325
    %v1668 = vunpack.c.h.b16 %v1325
    %v1669 = vunpack.c.l.b16 %v1326
    %v1670 = vunpack.c.h.b16 %v1326
    %v1671 = vunpack.c.l.b16 %v1327
    %v1672 = vunpack.c.h.b16 %v1327
    %v1673 = vunpack.c.l.b16 %v1328
    %v1674 = vunpack.c.h.b16 %v1328
    %v1675 = vunpack.c.l.b16 %v1329
    %v1676 = vunpack.c.h.b16 %v1329
    %v1677 = vunpack.c.l.b16 %v1330
    %v1678 = vunpack.c.h.b16 %v1330
    %v1679 = vunpack.c.l.b16 %v1331
    %v1680 = vunpack.c.h.b16 %v1331
    %v1681 = vunpack.c.l.b16 %v1332
    %v1682 = vunpack.c.h.b16 %v1332
    %v1683 = vunpack.c.l.b16 %v1333
    %v1684 = vunpack.c.h.b16 %v1333
    %v1685 = vunpack.c.l.b16 %v1334
    %v1686 = vunpack.c.h.b16 %v1334
    %v1687 = vunpack.c.l.b16 %v1335
    %v1688 = vunpack.c.h.b16 %v1335
    %v1689 = vunpack.c.l.b16 %v1336
    %v1690 = vunpack.c.h.b16 %v1336
    %v1691 = vunpack.c.l.b16 %v1337
    %v1692 = vunpack.c.h.b16 %v1337
    %v1693 = vunpack.c.l.b16 %v1338
    %v1694 = vunpack.c.h.b16 %v1338
    %v1695 = vunpack.c.l.b16 %v1339
    %v1696 = vunpack.c.h.b16 %v1339
    %v1697 = vunpack.c.l.b16 %v1340
    %v1698 = vunpack.c.h.b16 %v1340
    %v1699 = vunpack.c.l.b16 %v1341
    %v1700 = vunpack.c.h.b16 %v1341
    %v1701 = vunpack.c.l.b16 %v1342
    %v1702 = vunpack.c.h.b16 %v1342
    %v1703 = vunpack.c.l.b16 %v1343
    %v1704 = vunpack.c.h.b16 %v1343
    %v1705 = vunpack.c.l.b16 %v1344
    %v1706 = vunpack.c.h.b16 %v1344
    %v1707 = vunpack.c.l.b16 %v1345
    %v1708 = vunpack.c.h.b16 %v1345
    %v1709 = vunpack.c.l.b16 %v1346
    %v1710 = vunpack.c.h.b16 %v1346
    %v1711 = vunpack.c.l.b16 %v1347
    %v1712 = vunpack.c.h.b16 %v1347
    %v1713 = vunpack.c.l.b16 %v1348
    %v1714 = vunpack.c.h.b16 %v1348
    %v1715 = vunpack.c.l.b16 %v1349
    %v1716 = vunpack.c.h.b16 %v1349
    %v1717 = vunpack.c.l.b16 %v1350
    %v1718 = vunpack.c.h.b16 %v1350
    %v1719 = vunpack.c.l.b16 %v1351
    %v1720 = vunpack.c.h.b16 %v1351
    %v1721 = vunpack.c.l.b16 %v1352
    %v1722 = vunpack.c.h.b16 %v1352
    %v1723 = vunpack.c.l.b16 %v1353
    %v1724 = vunpack.c.h.b16 %v1353
    %v1725 = vunpack.c.l.b16 %v1354
    %v1726 = vunpack.c.h.b16 %v1354
    %v1727 = vunpack.c.l.b16 %v1355
    %v1728 = vunpack.c.h.b16 %v1355
    %v1729 = vunpack.c.l.b16 %v1356
    %v1730 = vunpack.c.h.b16 %v1356
    %v1731 = vunpack.c.l.b16 %v1357
    %v1732 = vunpack.c.h.b16 %v1357
    %v1733 = vunpack.c.l.b16 %v1358
    %v1734 = vunpack.c.h.b16 %v1358
    %v1735 = vunpack.c.l.b16 %v1359
    %v1736 = vunpack.c.h.b16 %v1359
    %v1737 = vunpack.c.l.b16 %v1360
    %v1738 = vunpack.c.h.b16 %v1360
    %v1739 = vunpack.c.l.b16 %v1361
    %v1740 = vunpack.c.h.b16 %v1361
    %v1741 = vunpack.c.l.b16 %v1362
    %v1742 = vunpack.c.h.b16 %v1362
    %v1743 = vunpack.c.l.b16 %v1363
    %v1744 = vunpack.c.h.b16 %v1363
    %v1745 = vunpack.c.l.b16 %v1364
    %v1746 = vunpack.c.h.b16 %v1364
    %v1747 = vunpack.c.l.b16 %v1365
    %v1748 = vunpack.c.h.b16 %v1365
    %v1749 = vunpack.c.l.b16 %v1366
    %v1750 = vunpack.c.h.b16 %v1366
    %v1751 = vunpack.c.l.b16 %v1367
    %v1752 = vunpack.c.h.b16 %v1367
    %v1753 = vunpack.c.l.b16 %v1368
    %v1754 = vunpack.c.h.b16 %v1368
    %v1755 = vunpack.c.l.b16 %v1369
    %v1756 = vunpack.c.h.b16 %v1369
    %v1757 = vunpack.c.l.b16 %v1370
    %v1758 = vunpack.c.h.b16 %v1370
    %v1759 = vunpack.c.l.b16 %v1371
    %v1760 = vunpack.c.h.b16 %v1371
    %v1761 = vunpack.c.l.b16 %v1372
    %v1762 = vunpack.c.h.b16 %v1372
    %v1763 = vunpack.c.l.b16 %v1373
    %v1764 = vunpack.c.h.b16 %v1373
    %v1765 = vunpack.c.l.b16 %v1374
    %v1766 = vunpack.c.h.b16 %v1374
    %v1767 = vunpack.c.l.b16 %v1375
    %v1768 = vunpack.c.h.b16 %v1375
    %v1769 = vunpack.c.l.b16 %v1376
    %v1770 = vunpack.c.h.b16 %v1376
    %v1771 = vpack.c.b16 %v1519, %v1515
    %v1772 = vpack.c.b16 %v1520, %v1516
    %v1773 = vpack.c.b16 %v1521, %v1517
    %v1774 = vpack.c.b16 %v1522, %v1518
    %v1775 = vpack.c.b16 %v1527, %v1523
    %v1776 = vpack.c.b16 %v1528, %v1524
    %v1777 = vpack.c.b16 %v1529, %v1525
    %v1778 = vpack.c.b16 %v1530, %v1526
    %v1779 = vpack.c.b16 %v1535, %v1531
    %v1780 = vpack.c.b16 %v1536, %v1532
    %v1781 = vpack.c.b16 %v1537, %v1533
    %v1782 = vpack.c.b16 %v1538, %v1534
    %v1783 = vpack.c.b16 %v1543, %v1539
    %v1784 = vpack.c.b16 %v1544, %v1540
    %v1785 = vpack.c.b16 %v1545, %v1541
    %v1786 = vpack.c.b16 %v1546, %v1542
    %v1787 = vpack.c.b16 %v1551, %v1547
    %v1788 = vpack.c.b16 %v1552, %v1548
    %v1789 = vpack.c.b16 %v1553, %v1549
    %v1790 = vpack.c.b16 %v1554, %v1550
    %v1791 = vpack.c.b16 %v1559, %v1555
    %v1792 = vpack.c.b16 %v1560, %v1556
    %v1793 = vpack.c.b16 %v1561, %v1557
    %v1794 = vpack.c.b16 %v1562, %v1558
    %v1795 = vpack.c.b16 %v1567, %v1563
    %v1796 = vpack.c.b16 %v1568, %v1564
    %v1797 = vpack.c.b16 %v1569, %v1565
    %v1798 = vpack.c.b16 %v1570, %v1566
    %v1799 = vpack.c.b16 %v1575, %v1571
    %v1800 = vpack.c.b16 %v1576, %v1572
    %v1801 = vpack.c.b16 %v1577, %v1573
    %v1802 = vpack.c.b16 %v1578, %v1574
    %v1803 = vpack.c.b16 %v1583, %v1579
    %v1804 = vpack.c.b16 %v1584, %v1580
    %v1805 = vpack.c.b16 %v1585, %v1581
    %v1806 = vpack.c.b16 %v1586, %v1582
    %v1807 = vpack.c.b16 %v1591, %v1587
    %v1808 = vpack.c.b16 %v1592, %v1588
    %v1809 = vpack.c.b16 %v1593, %v1589
    %v1810 = vpack.c.b16 %v1594, %v1590
    %v1811 = vpack.c.b16 %v1599, %v1595
    %v1812 = vpack.c.b16 %v1600, %v1596
    %v1813 = vpack.c.b16 %v1601, %v1597
    %v1814 = vpack.c.b16 %v1602, %v1598
    %v1815 = vpack.c.b16 %v1607, %v1603
    %v1816 = vpack.c.b16 %v1608, %v1604
    %v1817 = vpack.c.b16 %v1609, %v1605
    %v1818 = vpack.c.b16 %v1610, %v1606
    %v1819 = vpack.c.b16 %v1615, %v1611
    %v1820 = vpack.c.b16 %v1616, %v1612
    %v1821 = vpack.c.b16 %v1617, %v1613
    %v1822 = vpack.c.b16 %v1618, %v1614
    %v1823 = vpack.c.b16 %v1623, %v1619
    %v1824 = vpack.c.b16 %v1624, %v1620
    %v1825 = vpack.c.b16 %v1625, %v1621
    %v1826 = vpack.c.b16 %v1626, %v1622
    %v1827 = vpack.c.b16 %v1631, %v1627
    %v1828 = vpack.c.b16 %v1632, %v1628
    %v1829 = vpack.c.b16 %v1633, %v1629
    %v1830 = vpack.c.b16 %v1634, %v1630
    %v1831 = vpack.c.b16 %v1639, %v1635
    %v1832 = vpack.c.b16 %v1640, %v1636
    %v1833 = vpack.c.b16 %v1641, %v1637
    %v1834 = vpack.c.b16 %v1642, %v1638
    %v1835 = vpack.c.b16 %v1647, %v1643
    %v1836 = vpack.c.b16 %v1648, %v1644
    %v1837 = vpack.c.b16 %v1649, %v1645
    %v1838 = vpack.c.b16 %v1650, %v1646
    %v1839 = vpack.c.b16 %v1655, %v1651
    %v1840 = vpack.c.b16 %v1656, %v1652
    %v1841 = vpack.c.b16 %v1657, %v1653
    %v1842 = vpack.c.b16 %v1658, %v1654
    %v1843 = vpack.c.b16 %v1663, %v1659
    %v1844 = vpack.c.b16 %v1664, %v1660
    %v1845 = vpack.c.b16 %v1665, %v1661
    %v1846 = vpack.c.b16 %v1666, %v1662
    %v1847 = vpack.c.b16 %v1671, %v1667
    %v1848 = vpack.c.b16 %v1672, %v1668
    %v1849 = vpack.c.b16 %v1673, %v1669
    %v1850 = vpack.c.b16 %v1674, %v1670
    %v1851 = vpack.c.b16 %v1679, %v1675
    %v1852 = vpack.c.b16 %v1680, %v1676
    %v1853 = vpack.c.b16 %v1681, %v1677
    %v1854 = vpack.c.b16 %v1682, %v1678
    %v1855 = vpack.c.b16 %v1687, %v1683
    %v1856 = vpack.c.b16 %v1688, %v1684
    %v1857 = vpack.c.b16 %v1689, %v1685
    %v1858 = vpack.c.b16 %v1690, %v1686
    %v1859 = vpack.c.b16 %v1695, %v1691
    %v1860 = vpack.c.b16 %v1696, %v1692
    %v1861 = vpack.c.b16 %v1697, %v1693
    %v1862 = vpack.c.b16 %v1698, %v1694
    %v1863 = vpack.c.b16 %v1703, %v1699
    %v1864 = vpack.c.b16 %v1704, %v1700
    %v1865 = vpack.c.b16 %v1705, %v1701
    %v1866 = vpack.c.b16 %v1706, %v1702
    %v1867 = vpack.c.b16 %v1711, %v1707
    %v1868 = vpack.c.b16 %v1712, %v1708
    %v1869 = vpack.c.b16 %v1713, %v1709
    %v1870 = vpack.c.b16 %v1714, %v1710
    %v1871 = vpack.c.b16 %v1719, %v1715
    %v1872 = vpack.c.b16 %v1720, %v1716
    %v1873 = vpack.c.b16 %v1721, %v1717
    %v1874 = vpack.c.b16 %v1722, %v1718
    %v1875 = vpack.c.b16 %v1727, %v1723
    %v1876 = vpack.c.b16 %v1728, %v1724
    %v1877 = vpack.c.b16 %v1729, %v1725
    %v1878 = vpack.c.b16 %v1730, %v1726
    %v1879 = vpack.c.b16 %v1735, %v1731
    %v1880 = vpack.c.b16 %v1736, %v1732
    %v1881 = vpack.c.b16 %v1737, %v1733
    %v1882 = vpack.c.b16 %v1738, %v1734
    %v1883 = vpack.c.b16 %v1743, %v1739
    %v1884 = vpack.c.b16 %v1744, %v1740
    %v1885 = vpack.c.b16 %v1745, %v1741
    %v1886 = vpack.c.b16 %v1746, %v1742
    %v1887 = vpack.c.b16 %v1751, %v1747
    %v1888 = vpack.c.b16 %v1752, %v1748
    %v1889 = vpack.c.b16 %v1753, %v1749
    %v1890 = vpack.c.b16 %v1754, %v1750
    %v1891 = vpack.c.b16 %v1759, %v1755
    %v1892 = vpack.c.b16 %v1760, %v1756
    %v1893 = vpack.c.b16 %v1761, %v1757
    %v1894 = vpack.c.b16 %v1762, %v1758
    %v1895 = vpack.c.b16 %v1767, %v1763
    %v1896 = vpack.c.b16 %v1768, %v1764
    %v1897 = vpack.c.b16 %v1769, %v1765
    %v1898 = vpack.c.b16 %v1770, %v1766
    %2027 = vmatpush.bf16.msra.mxu0 %v1799
    %2028 = vmatpush.bf16.msra.mxu0 %v1795
    %2029 = vmatpush.bf16.msra.mxu0 %v1791
    %2030 = vmatpush.bf16.msra.mxu0 %v1787
    %2031 = vmatpush.bf16.msra.mxu0 %v1783
    %2032 = vmatpush.bf16.msra.mxu0 %v1779
    %2033 = vmatpush.bf16.msra.mxu0 %v1775
    %2034 = vmatpush.bf16.msra.mxu0 %v1771
    %2035 = vmatmul.bf16.gmra.mxu0 %v1245
    %v2036 = vpop.f32.mrf.mxu0
    %v2037 = vadd.f32 %v1379, %v2036
    %v2038 = vpop.f32.mrf.mxu0
    %2039 = vdwg.mxu0
    %2040 = vmatpush.bf16.msra.mxu0 %v1831
    %2041 = vmatpush.bf16.msra.mxu0 %v1827
    %2042 = vmatpush.bf16.msra.mxu0 %v1823
    %2043 = vmatpush.bf16.msra.mxu0 %v1819
    %2044 = vmatpush.bf16.msra.mxu0 %v1815
    %2045 = vmatpush.bf16.msra.mxu0 %v1811
    %2046 = vmatpush.bf16.msra.mxu0 %v1807
    %2047 = vmatpush.bf16.msra.mxu0 %v1803
    %2048 = vmatmul.bf16.gmra.mxu0 %v1246
    %v2049 = vpop.f32.mrf.mxu0
    %v2050 = vadd.f32 %v2037, %v2049
    %v2051 = vpop.f32.mrf.mxu0
    %2052 = vdwg.mxu0
    %2053 = vmatpush.bf16.msra.mxu0 %v1863
    %2054 = vmatpush.bf16.msra.mxu0 %v1859
    %2055 = vmatpush.bf16.msra.mxu0 %v1855
    %2056 = vmatpush.bf16.msra.mxu0 %v1851
    %2057 = vmatpush.bf16.msra.mxu0 %v1847
    %2058 = vmatpush.bf16.msra.mxu0 %v1843
    %2059 = vmatpush.bf16.msra.mxu0 %v1839
    %2060 = vmatpush.bf16.msra.mxu0 %v1835
    %2061 = vmatmul.bf16.gmra.mxu0 %v1247
    %v2062 = vpop.f32.mrf.mxu0
    %v2063 = vadd.f32 %v2050, %v2062
    %v2064 = vpop.f32.mrf.mxu0
    %2065 = vdwg.mxu0
    %2066 = vmatpush.bf16.msra.mxu0 %v1895
    %2067 = vmatpush.bf16.msra.mxu0 %v1891
    %2068 = vmatpush.bf16.msra.mxu0 %v1887
    %2069 = vmatpush.bf16.msra.mxu0 %v1883
    %2070 = vmatpush.bf16.msra.mxu0 %v1879
    %2071 = vmatpush.bf16.msra.mxu0 %v1875
    %2072 = vmatpush.bf16.msra.mxu0 %v1871
    %2073 = vmatpush.bf16.msra.mxu0 %v1867
    %2074 = vmatmul.bf16.gmra.mxu0 %v1248
    %v2075 = vpop.f32.mrf.mxu0
    %v2076 = vadd.f32 %v2063, %v2075
    %v2077 = vpop.f32.mrf.mxu0
    %2078 = vdwg.mxu0
    %2079 = vmatpush.bf16.msra.mxu0 %v1800
    %2080 = vmatpush.bf16.msra.mxu0 %v1796
    %2081 = vmatpush.bf16.msra.mxu0 %v1792
    %2082 = vmatpush.bf16.msra.mxu0 %v1788
    %2083 = vmatpush.bf16.msra.mxu0 %v1784
    %2084 = vmatpush.bf16.msra.mxu0 %v1780
    %2085 = vmatpush.bf16.msra.mxu0 %v1776
    %2086 = vmatpush.bf16.msra.mxu0 %v1772
    %2087 = vmatmul.bf16.gmra.mxu0 %v1245
    %v2088 = vpop.f32.mrf.mxu0
    %v2089 = vadd.f32 %v1380, %v2088
    %v2090 = vpop.f32.mrf.mxu0
    %2091 = vdwg.mxu0
    %2092 = vmatpush.bf16.msra.mxu0 %v1832
    %2093 = vmatpush.bf16.msra.mxu0 %v1828
    %2094 = vmatpush.bf16.msra.mxu0 %v1824
    %2095 = vmatpush.bf16.msra.mxu0 %v1820
    %2096 = vmatpush.bf16.msra.mxu0 %v1816
    %2097 = vmatpush.bf16.msra.mxu0 %v1812
    %2098 = vmatpush.bf16.msra.mxu0 %v1808
    %2099 = vmatpush.bf16.msra.mxu0 %v1804
    %2100 = vmatmul.bf16.gmra.mxu0 %v1246
    %v2101 = vpop.f32.mrf.mxu0
    %v2102 = vadd.f32 %v2089, %v2101
    %v2103 = vpop.f32.mrf.mxu0
    %2104 = vdwg.mxu0
    %2105 = vmatpush.bf16.msra.mxu0 %v1864
    %2106 = vmatpush.bf16.msra.mxu0 %v1860
    %2107 = vmatpush.bf16.msra.mxu0 %v1856
    %2108 = vmatpush.bf16.msra.mxu0 %v1852
    %2109 = vmatpush.bf16.msra.mxu0 %v1848
    %2110 = vmatpush.bf16.msra.mxu0 %v1844
    %2111 = vmatpush.bf16.msra.mxu0 %v1840
    %2112 = vmatpush.bf16.msra.mxu0 %v1836
    %2113 = vmatmul.bf16.gmra.mxu0 %v1247
    %v2114 = vpop.f32.mrf.mxu0
    %v2115 = vadd.f32 %v2102, %v2114
    %v2116 = vpop.f32.mrf.mxu0
    %2117 = vdwg.mxu0
    %2118 = vmatpush.bf16.msra.mxu0 %v1896
    %2119 = vmatpush.bf16.msra.mxu0 %v1892
    %2120 = vmatpush.bf16.msra.mxu0 %v1888
    %2121 = vmatpush.bf16.msra.mxu0 %v1884
    %2122 = vmatpush.bf16.msra.mxu0 %v1880
    %2123 = vmatpush.bf16.msra.mxu0 %v1876
    %2124 = vmatpush.bf16.msra.mxu0 %v1872
    %2125 = vmatpush.bf16.msra.mxu0 %v1868
    %2126 = vmatmul.bf16.gmra.mxu0 %v1248
    %v2127 = vpop.f32.mrf.mxu0
    %v2128 = vadd.f32 %v2115, %v2127
    %v2129 = vpop.f32.mrf.mxu0
    %2130 = vdwg.mxu0
    %2131 = vmatpush.bf16.msra.mxu0 %v1801
    %2132 = vmatpush.bf16.msra.mxu0 %v1797
    %2133 = vmatpush.bf16.msra.mxu0 %v1793
    %2134 = vmatpush.bf16.msra.mxu0 %v1789
    %2135 = vmatpush.bf16.msra.mxu0 %v1785
    %2136 = vmatpush.bf16.msra.mxu0 %v1781
    %2137 = vmatpush.bf16.msra.mxu0 %v1777
    %2138 = vmatpush.bf16.msra.mxu0 %v1773
    %2139 = vmatmul.bf16.gmra.mxu0 %v1245
    %v2140 = vpop.f32.mrf.mxu0
    %v2141 = vadd.f32 %v1381, %v2140
    %v2142 = vpop.f32.mrf.mxu0
    %2143 = vdwg.mxu0
    %2144 = vmatpush.bf16.msra.mxu0 %v1833
    %2145 = vmatpush.bf16.msra.mxu0 %v1829
    %2146 = vmatpush.bf16.msra.mxu0 %v1825
    %2147 = vmatpush.bf16.msra.mxu0 %v1821
    %2148 = vmatpush.bf16.msra.mxu0 %v1817
    %2149 = vmatpush.bf16.msra.mxu0 %v1813
    %2150 = vmatpush.bf16.msra.mxu0 %v1809
    %2151 = vmatpush.bf16.msra.mxu0 %v1805
    %2152 = vmatmul.bf16.gmra.mxu0 %v1246
    %v2153 = vpop.f32.mrf.mxu0
    %v2154 = vadd.f32 %v2141, %v2153
    %v2155 = vpop.f32.mrf.mxu0
    %2156 = vdwg.mxu0
    %2157 = vmatpush.bf16.msra.mxu0 %v1865
    %2158 = vmatpush.bf16.msra.mxu0 %v1861
    %2159 = vmatpush.bf16.msra.mxu0 %v1857
    %2160 = vmatpush.bf16.msra.mxu0 %v1853
    %2161 = vmatpush.bf16.msra.mxu0 %v1849
    %2162 = vmatpush.bf16.msra.mxu0 %v1845
    %2163 = vmatpush.bf16.msra.mxu0 %v1841
    %2164 = vmatpush.bf16.msra.mxu0 %v1837
    %2165 = vmatmul.bf16.gmra.mxu0 %v1247
    %v2166 = vpop.f32.mrf.mxu0
    %v2167 = vadd.f32 %v2154, %v2166
    %v2168 = vpop.f32.mrf.mxu0
    %2169 = vdwg.mxu0
    %2170 = vmatpush.bf16.msra.mxu0 %v1897
    %2171 = vmatpush.bf16.msra.mxu0 %v1893
    %2172 = vmatpush.bf16.msra.mxu0 %v1889
    %2173 = vmatpush.bf16.msra.mxu0 %v1885
    %2174 = vmatpush.bf16.msra.mxu0 %v1881
    %2175 = vmatpush.bf16.msra.mxu0 %v1877
    %2176 = vmatpush.bf16.msra.mxu0 %v1873
    %2177 = vmatpush.bf16.msra.mxu0 %v1869
    %2178 = vmatmul.bf16.gmra.mxu0 %v1248
    %v2179 = vpop.f32.mrf.mxu0
    %v2180 = vadd.f32 %v2167, %v2179
    %v2181 = vpop.f32.mrf.mxu0
    %2182 = vdwg.mxu0
    %2183 = vmatpush.bf16.msra.mxu0 %v1802
    %2184 = vmatpush.bf16.msra.mxu0 %v1798
    %2185 = vmatpush.bf16.msra.mxu0 %v1794
    %2186 = vmatpush.bf16.msra.mxu0 %v1790
    %2187 = vmatpush.bf16.msra.mxu0 %v1786
    %2188 = vmatpush.bf16.msra.mxu0 %v1782
    %2189 = vmatpush.bf16.msra.mxu0 %v1778
    %2190 = vmatpush.bf16.msra.mxu0 %v1774
    %2191 = vmatmul.bf16.gmra.mxu0 %v1245
    %v2192 = vpop.f32.mrf.mxu0
    %v2193 = vadd.f32 %v1382, %v2192
    %v2194 = vpop.f32.mrf.mxu0
    %2195 = vdwg.mxu0
    %2196 = vmatpush.bf16.msra.mxu0 %v1834
    %2197 = vmatpush.bf16.msra.mxu0 %v1830
    %2198 = vmatpush.bf16.msra.mxu0 %v1826
    %2199 = vmatpush.bf16.msra.mxu0 %v1822
    %2200 = vmatpush.bf16.msra.mxu0 %v1818
    %2201 = vmatpush.bf16.msra.mxu0 %v1814
    %2202 = vmatpush.bf16.msra.mxu0 %v1810
    %2203 = vmatpush.bf16.msra.mxu0 %v1806
    %2204 = vmatmul.bf16.gmra.mxu0 %v1246
    %v2205 = vpop.f32.mrf.mxu0
    %v2206 = vadd.f32 %v2193, %v2205
    %v2207 = vpop.f32.mrf.mxu0
    %2208 = vdwg.mxu0
    %2209 = vmatpush.bf16.msra.mxu0 %v1866
    %2210 = vmatpush.bf16.msra.mxu0 %v1862
    %2211 = vmatpush.bf16.msra.mxu0 %v1858
    %2212 = vmatpush.bf16.msra.mxu0 %v1854
    %2213 = vmatpush.bf16.msra.mxu0 %v1850
    %2214 = vmatpush.bf16.msra.mxu0 %v1846
    %2215 = vmatpush.bf16.msra.mxu0 %v1842
    %2216 = vmatpush.bf16.msra.mxu0 %v1838
    %2217 = vmatmul.bf16.gmra.mxu0 %v1247
    %v2218 = vpop.f32.mrf.mxu0
    %v2219 = vadd.f32 %v2206, %v2218
    %v2220 = vpop.f32.mrf.mxu0
    %2221 = vdwg.mxu0
    %2222 = vmatpush.bf16.msra.mxu0 %v1898
    %2223 = vmatpush.bf16.msra.mxu0 %v1894
    %2224 = vmatpush.bf16.msra.mxu0 %v1890
    %2225 = vmatpush.bf16.msra.mxu0 %v1886
    %2226 = vmatpush.bf16.msra.mxu0 %v1882
    %2227 = vmatpush.bf16.msra.mxu0 %v1878
    %2228 = vmatpush.bf16.msra.mxu0 %v1874
    %2229 = vmatpush.bf16.msra.mxu0 %v1870
    %2230 = vmatmul.bf16.gmra.mxu0 %v1248
    %v2231 = vpop.f32.mrf.mxu0
    %v2232 = vadd.f32 %v2219, %v2231
    %v2233 = vpop.f32.mrf.mxu0
    %2234 = vdwg.mxu0
    %v2235 = vmax.f32 %v2076, 0.0
    %v2236 = vmax.f32 %v2128, 0.0
    %v2237 = vmax.f32 %v2180, 0.0
    %v2238 = vmax.f32 %v2232, 0.0
    %v2239 = vld [vmem:[%s7] sm:$0xf]
    %v2240 = vunpack.c.l.bf16 %v2239
    %v2242 = vperm.slane %v2240, 0
    %v2243 = vperm.slane %v2240, 2
    %v2244 = vperm.slane %v2240, 4
    %v2245 = vperm.slane %v2240, 6
    %v2250 = vperm.slane %v2242, 0
    %v2251 = vperm.slane %v2243, 0
    %v2252 = vperm.slane %v2244, 0
    %v2253 = vperm.slane %v2245, 0
    %v2254 = vmul.f32 %v2235, %v2250
    %v2255 = vmul.f32 %v2236, %v2251
    %v2256 = vmul.f32 %v2237, %v2252
    %v2257 = vmul.f32 %v2238, %v2253
    %v2258 = vadd.f32 %v2254, %v2255
    %v2259 = vadd.f32 %v2258, %v2256
    %v2260 = vadd.f32 %v2259, %v2257
    %2261 = vadd.xlane.f32.xlu0 %v2260
    %v2262 = vpop.xlane.xlu0 %2261
    %s2263 = sld [smem:[#allocation2]]
    %v2264 = vstv %s2263
    %v2265 = vadd.f32 %v2262, %v2264
    %vm2266 = vcmask 7168
    %2267 = vst.msk [vmem:[%s9] sm:$0xff] %vm2266, %v2265
    // Predicated region
    $region62: #{tpu_custom_call.1} parent=1 // pred_check
      _
    $region63: #{tpu_custom_call.1} parent=1 // pred_check_branch
      %2269 = sbr.rel (0) target = $region65
    $region64: #{tpu_custom_call.1} parent=1 // pred_region
      _
    $region65: #{tpu_custom_call.1} parent=1 // pred_fallthru
      _
    // Predicated region
    $region66: #{tpu_custom_call.1} parent=1 // pred_check
      _
    $region67: #{tpu_custom_call.1} parent=1 // pred_check_branch
      %2271 = sbr.rel (0) target = $region69
    $region68: #{tpu_custom_call.1} parent=1 // pred_region
      _
    $region69: #{tpu_custom_call.1} parent=1 // pred_fallthru
      _
    %2272 = vsyncpa [#allocation4], 1
    %2273 = vsyncpa [#allocation6], 1
    %2274 = vsyncpa [#allocation9], 1
    %2275 = vsyncpa [#allocation12], 1

</llo_original>
